<compile_context>
chip_gen: v7x
topology: tpu7x:2x2x1
jax: 0.10.0
libtpu: 0.0.40
codegen_flags: <defaults>
</compile_context>

<pallas_src>
import functools
import math

import jax
import jax.numpy as jnp
import numpy as np
from jax import lax
from jax.experimental import pallas as pl
from jax.experimental.pallas import tpu as pltpu

EMB_DIM = 200
HID_DIM = 64


# ------------------------------------------------------------------ reference LSTM cell
def _lstm_cell(x, h, c, wih, whh, b):
    """PyTorch nn.LSTM cell (gate order i, f, g, o). Shapes: x (B,E), h/c (B,H)."""
    H = HID_DIM
    gates = (jnp.dot(x, wih, preferred_element_type=jnp.float32)
             + jnp.dot(h, whh, preferred_element_type=jnp.float32)
             + b)
    i = jax.nn.sigmoid(gates[:, 0 * H:1 * H])
    f = jax.nn.sigmoid(gates[:, 1 * H:2 * H])
    g = jnp.tanh(gates[:, 2 * H:3 * H])
    o = jax.nn.sigmoid(gates[:, 3 * H:4 * H])
    c_new = f * c + i * g
    h_new = o * jnp.tanh(c_new)
    return h_new, c_new


# ----------------------------------------------------------------- fused seq2seq kernel
def _seq2seq_kernel(src_ref, trg_ref, enc_tab_ref, dec_tab_ref, hw_ref,
                    out_ref, g_scr, *, S, B, Tm1):
    H = HID_DIM
    G = 4 * H                      # 256
    V = enc_tab_ref.shape[0]       # 128 (vocab)
    O = out_ref.shape[1]           # 128 (vocab / out dim)
    f32, bf16 = jnp.float32, jnp.bfloat16

    # ----- encoder: fused (gather + input projection + bias) as one one-hot matmul ----
    src_oh = jnp.where(
        src_ref[...] == lax.broadcasted_iota(jnp.int32, (S * B, V), 1),
        1.0, 0.0).astype(bf16)                                   # (S*B, V)
    g_scr[...] = jnp.dot(src_oh, enc_tab_ref[...],
                         preferred_element_type=f32).reshape(S, B, G)

    enc_whh = hw_ref[:, 0:G]                                     # (H, 4H) bf16, hoisted

    def enc_step(s, hc):
        h, c = hc
        gates = g_scr[s] + jnp.dot(h.astype(bf16), enc_whh,
                                   preferred_element_type=f32)   # (B, 4H)
        i = jax.nn.sigmoid(gates[:, 0 * H:1 * H])
        f = jax.nn.sigmoid(gates[:, 1 * H:2 * H])
        g = jnp.tanh(gates[:, 2 * H:3 * H])
        o = jax.nn.sigmoid(gates[:, 3 * H:4 * H])
        c = f * c + i * g
        h = o * jnp.tanh(c)
        return (h, c)

    h0, c0 = lax.fori_loop(
        0, S, enc_step,
        (jnp.zeros((B, H), f32), jnp.zeros((B, H), f32)),
        unroll=True)

    # ----- decoder: (h0, c0) reused unchanged every step, so all T-1 steps fuse --------
    trg_oh = jnp.where(
        trg_ref[...] == lax.broadcasted_iota(jnp.int32, (Tm1 * B, V), 1),
        1.0, 0.0).astype(bf16)                                   # (Tm1*B, V)
    # one matmul -> decoder gate x-part (+dec_b) and out-layer x-part (+bo)
    gx = jnp.dot(trg_oh, dec_tab_ref[...], preferred_element_type=f32)   # (Tm1*B, G+O)

    # one matmul -> recurrent gate term AND the h0 contribution to the output layer
    h0_proj = jnp.dot(h0.astype(bf16), hw_ref[:, G:2 * G + O],
                      preferred_element_type=f32)                # (B, G+O)
    rec = h0_proj[:, 0:G]
    const_out = h0_proj[:, G:G + O] + jnp.dot(
        c0.astype(bf16), hw_ref[:, 2 * G + O:2 * G + 2 * O],
        preferred_element_type=f32)                              # (B, O)

    gates = gx[:, 0:G].reshape(Tm1, B, G) + rec[None]
    i = jax.nn.sigmoid(gates[..., 0 * H:1 * H])
    f = jax.nn.sigmoid(gates[..., 1 * H:2 * H])
    g = jnp.tanh(gates[..., 2 * H:3 * H])
    o = jax.nn.sigmoid(gates[..., 3 * H:4 * H])
    c_d = f * c0[None] + i * g
    h_d = o * jnp.tanh(c_d)                                      # (Tm1, B, H)

    out = (jnp.dot(h_d.reshape(Tm1 * B, H).astype(bf16),
                   hw_ref[:, 2 * G + 2 * O:2 * G + 3 * O],
                   preferred_element_type=f32)
           + gx[:, G:G + O])
    out = out.reshape(Tm1, B, O) + const_out[None]
    out_ref[...] = out.reshape(Tm1 * B, O).astype(out_ref.dtype)


def seq2seq_forward(packed, src, trg):
    """Pallas forward. src (S,B) int32, trg (T,B) int32 -> (T-1, B, OUT_DIM) float32."""
    S, B = src.shape
    T = trg.shape[0]
    Tm1 = T - 1
    H = HID_DIM
    G = 4 * H
    V = packed["enc_tab"].shape[0]
    O = packed["dec_tab"].shape[1] - G

    # Index prep only (the gathers themselves happen in-kernel as one-hot matmuls).
    src_idx = src.reshape(S * B, 1).astype(jnp.int32)
    trg_idx = trg[:-1].reshape(Tm1 * B, 1).astype(jnp.int32)     # decoder inputs, steps 1..T-1

    kernel = functools.partial(_seq2seq_kernel, S=S, B=B, Tm1=Tm1)

    def full(shape):
        return pl.BlockSpec(shape, lambda *_: (0,) * len(shape))

    out = pl.pallas_call(
        kernel,
        out_shape=jax.ShapeDtypeStruct((Tm1 * B, O), jnp.float32),
        grid=(1,),
        in_specs=[
            full((S * B, 1)),            # src indices
            full((Tm1 * B, 1)),          # trg indices
            full((V, G)),                # enc_tab (bf16)
            full((V, G + O)),            # dec_tab (bf16)
            full((H, 2 * G + 3 * O)),    # packed h-side weights (bf16)
        ],
        out_specs=full((Tm1 * B, O)),
        scratch_shapes=[pltpu.VMEM((S, B, G), jnp.float32)],
        compiler_params=pltpu.CompilerParams(dimension_semantics=("arbitrary",)),
    )(src_idx, trg_idx, packed["enc_tab"], packed["dec_tab"], packed["hw"])
    return out.reshape(Tm1, B, O)


# ----------------------------------------------------------------------------- parameters
def init_params(key, out_dim):
    H, E = HID_DIM, EMB_DIM
    ks = jax.random.split(key, 12)
    kb = 1.0 / math.sqrt(H)

    def u(k, shape, bound):
        return jax.random.uniform(k, shape, jnp.float32, -bound, bound)

    # Embeddings (nn.Embedding default ~ N(0,1); SENT.vocab.vectors is synthetic here)
    enc_emb = jax.random.normal(ks[0], (out_dim, E), jnp.float32)
    dec_emb = jax.random.normal(ks[1], (out_dim, E), jnp.float32)
    # LSTMs: weight_ih (4H,E)^T, weight_hh (4H,H)^T, combined bias (bias_ih + bias_hh)
    enc_wih = u(ks[2], (E, 4 * H), kb)
    enc_whh = u(ks[3], (H, 4 * H), kb)
    enc_b = u(ks[4], (1, 4 * H), kb) + u(ks[5], (1, 4 * H), kb)
    dec_wih = u(ks[6], (E, 4 * H), kb)
    dec_whh = u(ks[7], (H, 4 * H), kb)
    dec_b = u(ks[8], (1, 4 * H), kb) + u(ks[9], (1, 4 * H), kb)
    # out_layer: Linear(E + 3H, out_dim), split by the concat order [h, x, h0, c0]
    fan_in = E + 3 * H
    kb2 = 1.0 / math.sqrt(fan_in)
    w_out = u(ks[10], (fan_in, out_dim), kb2)
    bo = u(ks[11], (1, out_dim), kb2)
    wo_h = w_out[0:H]
    wo_x = w_out[H:H + E]
    wo_h0 = w_out[H + E:H + E + H]
    wo_c0 = w_out[H + E + H:]
    return dict(enc_emb=enc_emb, dec_emb=dec_emb,
                enc_wih=enc_wih, enc_whh=enc_whh, enc_b=enc_b,
                dec_wih=dec_wih, dec_whh=dec_whh, dec_b=dec_b,
                wo_h=wo_h, wo_x=wo_x, wo_h0=wo_h0, wo_c0=wo_c0, bo=bo)


def pack_params(p):
    """Fold embeddings/projections/biases into the 3 kernel weight arrays (bf16)."""
    # enc_tab[v] = enc_emb[v] @ enc_wih + enc_b            -> (V, 4H)
    enc_tab = (p["enc_emb"] @ p["enc_wih"] + p["enc_b"]).astype(jnp.bfloat16)
    # dec_tab[v] = dec_emb[v] @ [dec_wih | wo_x] + [dec_b | bo]   -> (V, 4H + O)
    dec_tab = (p["dec_emb"] @ jnp.concatenate([p["dec_wih"], p["wo_x"]], axis=1)
               + jnp.concatenate([p["dec_b"], p["bo"]], axis=1)).astype(jnp.bfloat16)
    # packed h-side weights: [enc_whh | dec_whh | wo_h0 | wo_c0 | wo_h]  -> (H, 896)
    hw = jnp.concatenate([p["enc_whh"], p["dec_whh"], p["wo_h0"], p["wo_c0"], p["wo_h"]],
                         axis=1).astype(jnp.bfloat16)
    return dict(enc_tab=enc_tab, dec_tab=dec_tab, hw=hw)


# ----------------------------------------------------------------------- pure-JAX reference
def seq2seq_reference(params, src, trg):
    """Pure-JAX f32 reference with identical semantics, for validation."""
    B = src.shape[1]
    H = HID_DIM
    emb_src = params["enc_emb"][src]

    def enc_step(carry, x):
        h, c = carry
        h, c = _lstm_cell(x, h, c, params["enc_wih"], params["enc_whh"], params["enc_b"])
        return (h, c), None

    h0 = jnp.zeros((B, H), jnp.float32)
    (h_enc, c_enc), _ = jax.lax.scan(enc_step, (h0, h0), emb_src)

    emb_trg_in = params["dec_emb"][trg[:-1]]

    def dec_step(x):
        h, c = _lstm_cell(x, h_enc, c_enc, params["dec_wih"], params["dec_whh"], params["dec_b"])
        return (h @ params["wo_h"] + x @ params["wo_x"]
                + h_enc @ params["wo_h0"] + c_enc @ params["wo_c0"] + params["bo"])

    return jax.vmap(dec_step)(emb_trg_in)


if __name__ == "__main__":
    OUT_DIM = 128      # vocab size
    S, T, B = 8, 8, 8  # src_len, trg_len, batch

    key = jax.random.PRNGKey(0)
    pkey, skey, tkey = jax.random.split(key, 3)
    params = init_params(pkey, OUT_DIM)
    packed = pack_params(params)
    src = jax.random.randint(skey, (S, B), 0, OUT_DIM, dtype=jnp.int32)
    trg = jax.random.randint(tkey, (T, B), 0, OUT_DIM, dtype=jnp.int32)

    out = seq2seq_forward(packed, src, trg)
    out = jax.block_until_ready(out)
    assert out.shape == (T - 1, B, OUT_DIM), out.shape

    ref = jax.block_until_ready(seq2seq_reference(params, src, trg))
    # bf16 MXU operands -> relaxed tolerance vs the f32 reference.
    np.testing.assert_allclose(np.asarray(out), np.asarray(ref), rtol=2e-2, atol=2e-2)

    print("KERNEL_OK")
</pallas_src>

<mosaic_0001>
module attributes {stable_mosaic.version = 11 : i64} {
  func.func @_seq2seq_kernel(%arg0: i32, %arg1: memref<64x1xi32, #tpu.memory_space<vmem>>, %arg2: memref<56x1xi32, #tpu.memory_space<vmem>>, %arg3: memref<128x256xbf16, #tpu.memory_space<vmem>>, %arg4: memref<128x384xbf16, #tpu.memory_space<vmem>>, %arg5: memref<64x896xbf16, #tpu.memory_space<vmem>>, %arg6: memref<56x128xf32, #tpu.memory_space<vmem>>, %arg7: memref<8x8x256xf32, #tpu.memory_space<vmem>>) attributes {dimension_semantics = [#tpu.dimension_semantics<arbitrary>], iteration_bounds = array<i64: 1>, scalar_prefetch = 0 : i64, scratch_operands = 1 : i64, tpu.core_type = #tpu.core_type<tc>, window_params = [{pipeline_mode = #tpu.pipeline_mode<synchronous>, transform_indices = @transform_0, window_bounds = array<i64: 64, 1>}, {pipeline_mode = #tpu.pipeline_mode<synchronous>, transform_indices = @transform_1, window_bounds = array<i64: 56, 1>}, {pipeline_mode = #tpu.pipeline_mode<synchronous>, transform_indices = @transform_2, window_bounds = array<i64: 128, 256>}, {pipeline_mode = #tpu.pipeline_mode<synchronous>, transform_indices = @transform_3, window_bounds = array<i64: 128, 384>}, {pipeline_mode = #tpu.pipeline_mode<synchronous>, transform_indices = @transform_4, window_bounds = array<i64: 64, 896>}, {pipeline_mode = #tpu.pipeline_mode<synchronous>, transform_indices = @transform_5, window_bounds = array<i64: 56, 128>}]} {
    %c0 = arith.constant 0 : index
    %c0_0 = arith.constant 0 : index
    %0 = vector.load %arg1[%c0, %c0_0] : memref<64x1xi32, #tpu.memory_space<vmem>>, vector<64x1xi32>
    %1 = tpu.iota {dimensions = array<i32: 1>} : vector<64x128xi32>
    %2 = vector.broadcast %0 : vector<64x1xi32> to vector<64x128xi32>
    %3 = arith.cmpi eq, %2, %1 : vector<64x128xi32>
    %cst = arith.constant 1.000000e+00 : f32
    %cst_1 = arith.constant 0.000000e+00 : f32
    %4 = vector.broadcast %cst : f32 to vector<64x128xf32>
    %5 = vector.broadcast %cst_1 : f32 to vector<64x128xf32>
    %6 = arith.select %3, %4, %5 : vector<64x128xi1>, vector<64x128xf32>
    %7 = arith.truncf %6 : vector<64x128xf32> to vector<64x128xbf16>
    %c0_2 = arith.constant 0 : index
    %c0_3 = arith.constant 0 : index
    %8 = vector.load %arg3[%c0_2, %c0_3] : memref<128x256xbf16, #tpu.memory_space<vmem>>, vector<128x256xbf16>
    %cst_4 = arith.constant dense<0.000000e+00> : vector<64x256xf32>
    %9 = tpu.matmul %7, %8, %cst_4 {dimension_numbers = #tpu.dot_dimension_numbers<[1], [0], [0], [1], [0, 0, 1, 1], [], []>} : vector<64x128xbf16>, vector<128x256xbf16>, vector<64x256xf32> -> vector<64x256xf32>
    %10 = vector.shape_cast %9 : vector<64x256xf32> to vector<8x8x256xf32>
    %c0_5 = arith.constant 0 : index
    %c0_6 = arith.constant 0 : index
    %c0_7 = arith.constant 0 : index
    %11 = vector.load %arg7[%c0_5, %c0_6, %c0_7] : memref<8x8x256xf32, #tpu.memory_space<vmem>>, vector<8x8x256xf32>
    tpu.vector_store %arg7[%c0_5, %c0_6, %c0_7], %10 {strides = array<i32>} : memref<8x8x256xf32, #tpu.memory_space<vmem>>, vector<8x8x256xf32>,
    %c0_8 = arith.constant 0 : index
    %c0_9 = arith.constant 0 : index
    %12 = vector.load %arg5[%c0_8, %c0_9] : memref<64x896xbf16, #tpu.memory_space<vmem>>, vector<64x256xbf16>
    %cst_10 = arith.constant 0.000000e+00 : f32
    %13 = vector.broadcast %cst_10 : f32 to vector<8x64xf32>
    %cst_11 = arith.constant 0.000000e+00 : f32
    %14 = vector.broadcast %cst_11 : f32 to vector<8x64xf32>
    %c0_i32 = arith.constant 0 : i32
    %15 = arith.index_cast %c0_i32 : i32 to index
    %c0_12 = arith.constant 0 : index
    %c0_13 = arith.constant 0 : index
    %16 = vector.load %arg7[%15, %c0_12, %c0_13] : memref<8x8x256xf32, #tpu.memory_space<vmem>>, vector<1x8x256xf32>
    %17 = vector.shape_cast %16 : vector<1x8x256xf32> to vector<8x256xf32>
    %18 = arith.truncf %13 : vector<8x64xf32> to vector<8x64xbf16>
    %cst_14 = arith.constant dense<0.000000e+00> : vector<8x256xf32>
    %19 = tpu.matmul %18, %12, %cst_14 {dimension_numbers = #tpu.dot_dimension_numbers<[1], [0], [0], [1], [0, 0, 1, 1], [], []>} : vector<8x64xbf16>, vector<64x256xbf16>, vector<8x256xf32> -> vector<8x256xf32>
    %20 = arith.addf %17, %19 : vector<8x256xf32>
    %21 = vector.extract_strided_slice %20 {offsets = [0, 0], sizes = [8, 64], strides = [1, 1]} : vector<8x256xf32> to vector<8x64xf32>
    %22 = arith.negf %21 : vector<8x64xf32>
    %23 = math.exp %22 : vector<8x64xf32>
    %cst_15 = arith.constant 1.000000e+00 : f32
    %24 = vector.broadcast %cst_15 : f32 to vector<8x64xf32>
    %25 = arith.addf %24, %23 : vector<8x64xf32>
    %26 = arith.divf %24, %25 : vector<8x64xf32>
    %27 = vector.extract_strided_slice %20 {offsets = [0, 64], sizes = [8, 64], strides = [1, 1]} : vector<8x256xf32> to vector<8x64xf32>
    %28 = arith.negf %27 : vector<8x64xf32>
    %29 = math.exp %28 : vector<8x64xf32>
    %cst_16 = arith.constant 1.000000e+00 : f32
    %30 = vector.broadcast %cst_16 : f32 to vector<8x64xf32>
    %31 = arith.addf %30, %29 : vector<8x64xf32>
    %32 = arith.divf %30, %31 : vector<8x64xf32>
    %33 = vector.extract_strided_slice %20 {offsets = [0, 128], sizes = [8, 64], strides = [1, 1]} : vector<8x256xf32> to vector<8x64xf32>
    %34 = math.tanh %33 : vector<8x64xf32>
    %35 = vector.extract_strided_slice %20 {offsets = [0, 192], sizes = [8, 64], strides = [1, 1]} : vector<8x256xf32> to vector<8x64xf32>
    %36 = arith.negf %35 : vector<8x64xf32>
    %37 = math.exp %36 : vector<8x64xf32>
    %cst_17 = arith.constant 1.000000e+00 : f32
    %38 = vector.broadcast %cst_17 : f32 to vector<8x64xf32>
    %39 = arith.addf %38, %37 : vector<8x64xf32>
    %40 = arith.divf %38, %39 : vector<8x64xf32>
    %41 = arith.mulf %32, %14 : vector<8x64xf32>
    %42 = arith.mulf %26, %34 : vector<8x64xf32>
    %43 = arith.addf %41, %42 : vector<8x64xf32>
    %44 = math.tanh %43 : vector<8x64xf32>
    %45 = arith.mulf %40, %44 : vector<8x64xf32>
    %c1_i32 = arith.constant 1 : i32
    %46 = arith.index_cast %c1_i32 : i32 to index
    %c0_18 = arith.constant 0 : index
    %c0_19 = arith.constant 0 : index
    %47 = vector.load %arg7[%46, %c0_18, %c0_19] : memref<8x8x256xf32, #tpu.memory_space<vmem>>, vector<1x8x256xf32>
    %48 = vector.shape_cast %47 : vector<1x8x256xf32> to vector<8x256xf32>
    %49 = arith.truncf %45 : vector<8x64xf32> to vector<8x64xbf16>
    %cst_20 = arith.constant dense<0.000000e+00> : vector<8x256xf32>
    %50 = tpu.matmul %49, %12, %cst_20 {dimension_numbers = #tpu.dot_dimension_numbers<[1], [0], [0], [1], [0, 0, 1, 1], [], []>} : vector<8x64xbf16>, vector<64x256xbf16>, vector<8x256xf32> -> vector<8x256xf32>
    %51 = arith.addf %48, %50 : vector<8x256xf32>
    %52 = vector.extract_strided_slice %51 {offsets = [0, 0], sizes = [8, 64], strides = [1, 1]} : vector<8x256xf32> to vector<8x64xf32>
    %53 = arith.negf %52 : vector<8x64xf32>
    %54 = math.exp %53 : vector<8x64xf32>
    %cst_21 = arith.constant 1.000000e+00 : f32
    %55 = vector.broadcast %cst_21 : f32 to vector<8x64xf32>
    %56 = arith.addf %55, %54 : vector<8x64xf32>
    %57 = arith.divf %55, %56 : vector<8x64xf32>
    %58 = vector.extract_strided_slice %51 {offsets = [0, 64], sizes = [8, 64], strides = [1, 1]} : vector<8x256xf32> to vector<8x64xf32>
    %59 = arith.negf %58 : vector<8x64xf32>
    %60 = math.exp %59 : vector<8x64xf32>
    %cst_22 = arith.constant 1.000000e+00 : f32
    %61 = vector.broadcast %cst_22 : f32 to vector<8x64xf32>
    %62 = arith.addf %61, %60 : vector<8x64xf32>
    %63 = arith.divf %61, %62 : vector<8x64xf32>
    %64 = vector.extract_strided_slice %51 {offsets = [0, 128], sizes = [8, 64], strides = [1, 1]} : vector<8x256xf32> to vector<8x64xf32>
    %65 = math.tanh %64 : vector<8x64xf32>
    %66 = vector.extract_strided_slice %51 {offsets = [0, 192], sizes = [8, 64], strides = [1, 1]} : vector<8x256xf32> to vector<8x64xf32>
    %67 = arith.negf %66 : vector<8x64xf32>
    %68 = math.exp %67 : vector<8x64xf32>
    %cst_23 = arith.constant 1.000000e+00 : f32
    %69 = vector.broadcast %cst_23 : f32 to vector<8x64xf32>
    %70 = arith.addf %69, %68 : vector<8x64xf32>
    %71 = arith.divf %69, %70 : vector<8x64xf32>
    %72 = arith.mulf %63, %43 : vector<8x64xf32>
    %73 = arith.mulf %57, %65 : vector<8x64xf32>
    %74 = arith.addf %72, %73 : vector<8x64xf32>
    %75 = math.tanh %74 : vector<8x64xf32>
    %76 = arith.mulf %71, %75 : vector<8x64xf32>
    %c2_i32 = arith.constant 2 : i32
    %77 = arith.index_cast %c2_i32 : i32 to index
    %c0_24 = arith.constant 0 : index
    %c0_25 = arith.constant 0 : index
    %78 = vector.load %arg7[%77, %c0_24, %c0_25] : memref<8x8x256xf32, #tpu.memory_space<vmem>>, vector<1x8x256xf32>
    %79 = vector.shape_cast %78 : vector<1x8x256xf32> to vector<8x256xf32>
    %80 = arith.truncf %76 : vector<8x64xf32> to vector<8x64xbf16>
    %cst_26 = arith.constant dense<0.000000e+00> : vector<8x256xf32>
    %81 = tpu.matmul %80, %12, %cst_26 {dimension_numbers = #tpu.dot_dimension_numbers<[1], [0], [0], [1], [0, 0, 1, 1], [], []>} : vector<8x64xbf16>, vector<64x256xbf16>, vector<8x256xf32> -> vector<8x256xf32>
    %82 = arith.addf %79, %81 : vector<8x256xf32>
    %83 = vector.extract_strided_slice %82 {offsets = [0, 0], sizes = [8, 64], strides = [1, 1]} : vector<8x256xf32> to vector<8x64xf32>
    %84 = arith.negf %83 : vector<8x64xf32>
    %85 = math.exp %84 : vector<8x64xf32>
    %cst_27 = arith.constant 1.000000e+00 : f32
    %86 = vector.broadcast %cst_27 : f32 to vector<8x64xf32>
    %87 = arith.addf %86, %85 : vector<8x64xf32>
    %88 = arith.divf %86, %87 : vector<8x64xf32>
    %89 = vector.extract_strided_slice %82 {offsets = [0, 64], sizes = [8, 64], strides = [1, 1]} : vector<8x256xf32> to vector<8x64xf32>
    %90 = arith.negf %89 : vector<8x64xf32>
    %91 = math.exp %90 : vector<8x64xf32>
    %cst_28 = arith.constant 1.000000e+00 : f32
    %92 = vector.broadcast %cst_28 : f32 to vector<8x64xf32>
    %93 = arith.addf %92, %91 : vector<8x64xf32>
    %94 = arith.divf %92, %93 : vector<8x64xf32>
    %95 = vector.extract_strided_slice %82 {offsets = [0, 128], sizes = [8, 64], strides = [1, 1]} : vector<8x256xf32> to vector<8x64xf32>
    %96 = math.tanh %95 : vector<8x64xf32>
    %97 = vector.extract_strided_slice %82 {offsets = [0, 192], sizes = [8, 64], strides = [1, 1]} : vector<8x256xf32> to vector<8x64xf32>
    %98 = arith.negf %97 : vector<8x64xf32>
    %99 = math.exp %98 : vector<8x64xf32>
    %cst_29 = arith.constant 1.000000e+00 : f32
    %100 = vector.broadcast %cst_29 : f32 to vector<8x64xf32>
    %101 = arith.addf %100, %99 : vector<8x64xf32>
    %102 = arith.divf %100, %101 : vector<8x64xf32>
    %103 = arith.mulf %94, %74 : vector<8x64xf32>
    %104 = arith.mulf %88, %96 : vector<8x64xf32>
    %105 = arith.addf %103, %104 : vector<8x64xf32>
    %106 = math.tanh %105 : vector<8x64xf32>
    %107 = arith.mulf %102, %106 : vector<8x64xf32>
    %c3_i32 = arith.constant 3 : i32
    %108 = arith.index_cast %c3_i32 : i32 to index
    %c0_30 = arith.constant 0 : index
    %c0_31 = arith.constant 0 : index
    %109 = vector.load %arg7[%108, %c0_30, %c0_31] : memref<8x8x256xf32, #tpu.memory_space<vmem>>, vector<1x8x256xf32>
    %110 = vector.shape_cast %109 : vector<1x8x256xf32> to vector<8x256xf32>
    %111 = arith.truncf %107 : vector<8x64xf32> to vector<8x64xbf16>
    %cst_32 = arith.constant dense<0.000000e+00> : vector<8x256xf32>
    %112 = tpu.matmul %111, %12, %cst_32 {dimension_numbers = #tpu.dot_dimension_numbers<[1], [0], [0], [1], [0, 0, 1, 1], [], []>} : vector<8x64xbf16>, vector<64x256xbf16>, vector<8x256xf32> -> vector<8x256xf32>
    %113 = arith.addf %110, %112 : vector<8x256xf32>
    %114 = vector.extract_strided_slice %113 {offsets = [0, 0], sizes = [8, 64], strides = [1, 1]} : vector<8x256xf32> to vector<8x64xf32>
    %115 = arith.negf %114 : vector<8x64xf32>
    %116 = math.exp %115 : vector<8x64xf32>
    %cst_33 = arith.constant 1.000000e+00 : f32
    %117 = vector.broadcast %cst_33 : f32 to vector<8x64xf32>
    %118 = arith.addf %117, %116 : vector<8x64xf32>
    %119 = arith.divf %117, %118 : vector<8x64xf32>
    %120 = vector.extract_strided_slice %113 {offsets = [0, 64], sizes = [8, 64], strides = [1, 1]} : vector<8x256xf32> to vector<8x64xf32>
    %121 = arith.negf %120 : vector<8x64xf32>
    %122 = math.exp %121 : vector<8x64xf32>
    %cst_34 = arith.constant 1.000000e+00 : f32
    %123 = vector.broadcast %cst_34 : f32 to vector<8x64xf32>
    %124 = arith.addf %123, %122 : vector<8x64xf32>
    %125 = arith.divf %123, %124 : vector<8x64xf32>
    %126 = vector.extract_strided_slice %113 {offsets = [0, 128], sizes = [8, 64], strides = [1, 1]} : vector<8x256xf32> to vector<8x64xf32>
    %127 = math.tanh %126 : vector<8x64xf32>
    %128 = vector.extract_strided_slice %113 {offsets = [0, 192], sizes = [8, 64], strides = [1, 1]} : vector<8x256xf32> to vector<8x64xf32>
    %129 = arith.negf %128 : vector<8x64xf32>
    %130 = math.exp %129 : vector<8x64xf32>
    %cst_35 = arith.constant 1.000000e+00 : f32
    %131 = vector.broadcast %cst_35 : f32 to vector<8x64xf32>
    %132 = arith.addf %131, %130 : vector<8x64xf32>
    %133 = arith.divf %131, %132 : vector<8x64xf32>
    %134 = arith.mulf %125, %105 : vector<8x64xf32>
    %135 = arith.mulf %119, %127 : vector<8x64xf32>
    %136 = arith.addf %134, %135 : vector<8x64xf32>
    %137 = math.tanh %136 : vector<8x64xf32>
    %138 = arith.mulf %133, %137 : vector<8x64xf32>
    %c4_i32 = arith.constant 4 : i32
    %139 = arith.index_cast %c4_i32 : i32 to index
    %c0_36 = arith.constant 0 : index
    %c0_37 = arith.constant 0 : index
    %140 = vector.load %arg7[%139, %c0_36, %c0_37] : memref<8x8x256xf32, #tpu.memory_space<vmem>>, vector<1x8x256xf32>
    %141 = vector.shape_cast %140 : vector<1x8x256xf32> to vector<8x256xf32>
    %142 = arith.truncf %138 : vector<8x64xf32> to vector<8x64xbf16>
    %cst_38 = arith.constant dense<0.000000e+00> : vector<8x256xf32>
    %143 = tpu.matmul %142, %12, %cst_38 {dimension_numbers = #tpu.dot_dimension_numbers<[1], [0], [0], [1], [0, 0, 1, 1], [], []>} : vector<8x64xbf16>, vector<64x256xbf16>, vector<8x256xf32> -> vector<8x256xf32>
    %144 = arith.addf %141, %143 : vector<8x256xf32>
    %145 = vector.extract_strided_slice %144 {offsets = [0, 0], sizes = [8, 64], strides = [1, 1]} : vector<8x256xf32> to vector<8x64xf32>
    %146 = arith.negf %145 : vector<8x64xf32>
    %147 = math.exp %146 : vector<8x64xf32>
    %cst_39 = arith.constant 1.000000e+00 : f32
    %148 = vector.broadcast %cst_39 : f32 to vector<8x64xf32>
    %149 = arith.addf %148, %147 : vector<8x64xf32>
    %150 = arith.divf %148, %149 : vector<8x64xf32>
    %151 = vector.extract_strided_slice %144 {offsets = [0, 64], sizes = [8, 64], strides = [1, 1]} : vector<8x256xf32> to vector<8x64xf32>
    %152 = arith.negf %151 : vector<8x64xf32>
    %153 = math.exp %152 : vector<8x64xf32>
    %cst_40 = arith.constant 1.000000e+00 : f32
    %154 = vector.broadcast %cst_40 : f32 to vector<8x64xf32>
    %155 = arith.addf %154, %153 : vector<8x64xf32>
    %156 = arith.divf %154, %155 : vector<8x64xf32>
    %157 = vector.extract_strided_slice %144 {offsets = [0, 128], sizes = [8, 64], strides = [1, 1]} : vector<8x256xf32> to vector<8x64xf32>
    %158 = math.tanh %157 : vector<8x64xf32>
    %159 = vector.extract_strided_slice %144 {offsets = [0, 192], sizes = [8, 64], strides = [1, 1]} : vector<8x256xf32> to vector<8x64xf32>
    %160 = arith.negf %159 : vector<8x64xf32>
    %161 = math.exp %160 : vector<8x64xf32>
    %cst_41 = arith.constant 1.000000e+00 : f32
    %162 = vector.broadcast %cst_41 : f32 to vector<8x64xf32>
    %163 = arith.addf %162, %161 : vector<8x64xf32>
    %164 = arith.divf %162, %163 : vector<8x64xf32>
    %165 = arith.mulf %156, %136 : vector<8x64xf32>
    %166 = arith.mulf %150, %158 : vector<8x64xf32>
    %167 = arith.addf %165, %166 : vector<8x64xf32>
    %168 = math.tanh %167 : vector<8x64xf32>
    %169 = arith.mulf %164, %168 : vector<8x64xf32>
    %c5_i32 = arith.constant 5 : i32
    %170 = arith.index_cast %c5_i32 : i32 to index
    %c0_42 = arith.constant 0 : index
    %c0_43 = arith.constant 0 : index
    %171 = vector.load %arg7[%170, %c0_42, %c0_43] : memref<8x8x256xf32, #tpu.memory_space<vmem>>, vector<1x8x256xf32>
    %172 = vector.shape_cast %171 : vector<1x8x256xf32> to vector<8x256xf32>
    %173 = arith.truncf %169 : vector<8x64xf32> to vector<8x64xbf16>
    %cst_44 = arith.constant dense<0.000000e+00> : vector<8x256xf32>
    %174 = tpu.matmul %173, %12, %cst_44 {dimension_numbers = #tpu.dot_dimension_numbers<[1], [0], [0], [1], [0, 0, 1, 1], [], []>} : vector<8x64xbf16>, vector<64x256xbf16>, vector<8x256xf32> -> vector<8x256xf32>
    %175 = arith.addf %172, %174 : vector<8x256xf32>
    %176 = vector.extract_strided_slice %175 {offsets = [0, 0], sizes = [8, 64], strides = [1, 1]} : vector<8x256xf32> to vector<8x64xf32>
    %177 = arith.negf %176 : vector<8x64xf32>
    %178 = math.exp %177 : vector<8x64xf32>
    %cst_45 = arith.constant 1.000000e+00 : f32
    %179 = vector.broadcast %cst_45 : f32 to vector<8x64xf32>
    %180 = arith.addf %179, %178 : vector<8x64xf32>
    %181 = arith.divf %179, %180 : vector<8x64xf32>
    %182 = vector.extract_strided_slice %175 {offsets = [0, 64], sizes = [8, 64], strides = [1, 1]} : vector<8x256xf32> to vector<8x64xf32>
    %183 = arith.negf %182 : vector<8x64xf32>
    %184 = math.exp %183 : vector<8x64xf32>
    %cst_46 = arith.constant 1.000000e+00 : f32
    %185 = vector.broadcast %cst_46 : f32 to vector<8x64xf32>
    %186 = arith.addf %185, %184 : vector<8x64xf32>
    %187 = arith.divf %185, %186 : vector<8x64xf32>
    %188 = vector.extract_strided_slice %175 {offsets = [0, 128], sizes = [8, 64], strides = [1, 1]} : vector<8x256xf32> to vector<8x64xf32>
    %189 = math.tanh %188 : vector<8x64xf32>
    %190 = vector.extract_strided_slice %175 {offsets = [0, 192], sizes = [8, 64], strides = [1, 1]} : vector<8x256xf32> to vector<8x64xf32>
    %191 = arith.negf %190 : vector<8x64xf32>
    %192 = math.exp %191 : vector<8x64xf32>
    %cst_47 = arith.constant 1.000000e+00 : f32
    %193 = vector.broadcast %cst_47 : f32 to vector<8x64xf32>
    %194 = arith.addf %193, %192 : vector<8x64xf32>
    %195 = arith.divf %193, %194 : vector<8x64xf32>
    %196 = arith.mulf %187, %167 : vector<8x64xf32>
    %197 = arith.mulf %181, %189 : vector<8x64xf32>
    %198 = arith.addf %196, %197 : vector<8x64xf32>
    %199 = math.tanh %198 : vector<8x64xf32>
    %200 = arith.mulf %195, %199 : vector<8x64xf32>
    %c6_i32 = arith.constant 6 : i32
    %201 = arith.index_cast %c6_i32 : i32 to index
    %c0_48 = arith.constant 0 : index
    %c0_49 = arith.constant 0 : index
    %202 = vector.load %arg7[%201, %c0_48, %c0_49] : memref<8x8x256xf32, #tpu.memory_space<vmem>>, vector<1x8x256xf32>
    %203 = vector.shape_cast %202 : vector<1x8x256xf32> to vector<8x256xf32>
    %204 = arith.truncf %200 : vector<8x64xf32> to vector<8x64xbf16>
    %cst_50 = arith.constant dense<0.000000e+00> : vector<8x256xf32>
    %205 = tpu.matmul %204, %12, %cst_50 {dimension_numbers = #tpu.dot_dimension_numbers<[1], [0], [0], [1], [0, 0, 1, 1], [], []>} : vector<8x64xbf16>, vector<64x256xbf16>, vector<8x256xf32> -> vector<8x256xf32>
    %206 = arith.addf %203, %205 : vector<8x256xf32>
    %207 = vector.extract_strided_slice %206 {offsets = [0, 0], sizes = [8, 64], strides = [1, 1]} : vector<8x256xf32> to vector<8x64xf32>
    %208 = arith.negf %207 : vector<8x64xf32>
    %209 = math.exp %208 : vector<8x64xf32>
    %cst_51 = arith.constant 1.000000e+00 : f32
    %210 = vector.broadcast %cst_51 : f32 to vector<8x64xf32>
    %211 = arith.addf %210, %209 : vector<8x64xf32>
    %212 = arith.divf %210, %211 : vector<8x64xf32>
    %213 = vector.extract_strided_slice %206 {offsets = [0, 64], sizes = [8, 64], strides = [1, 1]} : vector<8x256xf32> to vector<8x64xf32>
    %214 = arith.negf %213 : vector<8x64xf32>
    %215 = math.exp %214 : vector<8x64xf32>
    %cst_52 = arith.constant 1.000000e+00 : f32
    %216 = vector.broadcast %cst_52 : f32 to vector<8x64xf32>
    %217 = arith.addf %216, %215 : vector<8x64xf32>
    %218 = arith.divf %216, %217 : vector<8x64xf32>
    %219 = vector.extract_strided_slice %206 {offsets = [0, 128], sizes = [8, 64], strides = [1, 1]} : vector<8x256xf32> to vector<8x64xf32>
    %220 = math.tanh %219 : vector<8x64xf32>
    %221 = vector.extract_strided_slice %206 {offsets = [0, 192], sizes = [8, 64], strides = [1, 1]} : vector<8x256xf32> to vector<8x64xf32>
    %222 = arith.negf %221 : vector<8x64xf32>
    %223 = math.exp %222 : vector<8x64xf32>
    %cst_53 = arith.constant 1.000000e+00 : f32
    %224 = vector.broadcast %cst_53 : f32 to vector<8x64xf32>
    %225 = arith.addf %224, %223 : vector<8x64xf32>
    %226 = arith.divf %224, %225 : vector<8x64xf32>
    %227 = arith.mulf %218, %198 : vector<8x64xf32>
    %228 = arith.mulf %212, %220 : vector<8x64xf32>
    %229 = arith.addf %227, %228 : vector<8x64xf32>
    %230 = math.tanh %229 : vector<8x64xf32>
    %231 = arith.mulf %226, %230 : vector<8x64xf32>
    %c7_i32 = arith.constant 7 : i32
    %232 = arith.index_cast %c7_i32 : i32 to index
    %c0_54 = arith.constant 0 : index
    %c0_55 = arith.constant 0 : index
    %233 = vector.load %arg7[%232, %c0_54, %c0_55] : memref<8x8x256xf32, #tpu.memory_space<vmem>>, vector<1x8x256xf32>
    %234 = vector.shape_cast %233 : vector<1x8x256xf32> to vector<8x256xf32>
    %235 = arith.truncf %231 : vector<8x64xf32> to vector<8x64xbf16>
    %cst_56 = arith.constant dense<0.000000e+00> : vector<8x256xf32>
    %236 = tpu.matmul %235, %12, %cst_56 {dimension_numbers = #tpu.dot_dimension_numbers<[1], [0], [0], [1], [0, 0, 1, 1], [], []>} : vector<8x64xbf16>, vector<64x256xbf16>, vector<8x256xf32> -> vector<8x256xf32>
    %237 = arith.addf %234, %236 : vector<8x256xf32>
    %238 = vector.extract_strided_slice %237 {offsets = [0, 0], sizes = [8, 64], strides = [1, 1]} : vector<8x256xf32> to vector<8x64xf32>
    %239 = arith.negf %238 : vector<8x64xf32>
    %240 = math.exp %239 : vector<8x64xf32>
    %cst_57 = arith.constant 1.000000e+00 : f32
    %241 = vector.broadcast %cst_57 : f32 to vector<8x64xf32>
    %242 = arith.addf %241, %240 : vector<8x64xf32>
    %243 = arith.divf %241, %242 : vector<8x64xf32>
    %244 = vector.extract_strided_slice %237 {offsets = [0, 64], sizes = [8, 64], strides = [1, 1]} : vector<8x256xf32> to vector<8x64xf32>
    %245 = arith.negf %244 : vector<8x64xf32>
    %246 = math.exp %245 : vector<8x64xf32>
    %cst_58 = arith.constant 1.000000e+00 : f32
    %247 = vector.broadcast %cst_58 : f32 to vector<8x64xf32>
    %248 = arith.addf %247, %246 : vector<8x64xf32>
    %249 = arith.divf %247, %248 : vector<8x64xf32>
    %250 = vector.extract_strided_slice %237 {offsets = [0, 128], sizes = [8, 64], strides = [1, 1]} : vector<8x256xf32> to vector<8x64xf32>
    %251 = math.tanh %250 : vector<8x64xf32>
    %252 = vector.extract_strided_slice %237 {offsets = [0, 192], sizes = [8, 64], strides = [1, 1]} : vector<8x256xf32> to vector<8x64xf32>
    %253 = arith.negf %252 : vector<8x64xf32>
    %254 = math.exp %253 : vector<8x64xf32>
    %cst_59 = arith.constant 1.000000e+00 : f32
    %255 = vector.broadcast %cst_59 : f32 to vector<8x64xf32>
    %256 = arith.addf %255, %254 : vector<8x64xf32>
    %257 = arith.divf %255, %256 : vector<8x64xf32>
    %258 = arith.mulf %249, %229 : vector<8x64xf32>
    %259 = arith.mulf %243, %251 : vector<8x64xf32>
    %260 = arith.addf %258, %259 : vector<8x64xf32>
    %261 = math.tanh %260 : vector<8x64xf32>
    %262 = arith.mulf %257, %261 : vector<8x64xf32>
    %c8_i32 = arith.constant 8 : i32
    %c0_60 = arith.constant 0 : index
    %c0_61 = arith.constant 0 : index
    %263 = vector.load %arg2[%c0_60, %c0_61] : memref<56x1xi32, #tpu.memory_space<vmem>>, vector<56x1xi32>
    %264 = tpu.iota {dimensions = array<i32: 1>} : vector<56x128xi32>
    %265 = vector.broadcast %263 : vector<56x1xi32> to vector<56x128xi32>
    %266 = arith.cmpi eq, %265, %264 : vector<56x128xi32>
    %cst_62 = arith.constant 1.000000e+00 : f32
    %cst_63 = arith.constant 0.000000e+00 : f32
    %267 = vector.broadcast %cst_62 : f32 to vector<56x128xf32>
    %268 = vector.broadcast %cst_63 : f32 to vector<56x128xf32>
    %269 = arith.select %266, %267, %268 : vector<56x128xi1>, vector<56x128xf32>
    %270 = arith.truncf %269 : vector<56x128xf32> to vector<56x128xbf16>
    %c0_64 = arith.constant 0 : index
    %c0_65 = arith.constant 0 : index
    %271 = vector.load %arg4[%c0_64, %c0_65] : memref<128x384xbf16, #tpu.memory_space<vmem>>, vector<128x384xbf16>
    %cst_66 = arith.constant dense<0.000000e+00> : vector<56x384xf32>
    %272 = tpu.matmul %270, %271, %cst_66 {dimension_numbers = #tpu.dot_dimension_numbers<[1], [0], [0], [1], [0, 0, 1, 1], [], []>} : vector<56x128xbf16>, vector<128x384xbf16>, vector<56x384xf32> -> vector<56x384xf32>
    %273 = arith.truncf %262 : vector<8x64xf32> to vector<8x64xbf16>
    %c0_67 = arith.constant 0 : index
    %c256 = arith.constant 256 : index
    %274 = vector.load %arg5[%c0_67, %c256] : memref<64x896xbf16, #tpu.memory_space<vmem>>, vector<64x384xbf16>
    %cst_68 = arith.constant dense<0.000000e+00> : vector<8x384xf32>
    %275 = tpu.matmul %273, %274, %cst_68 {dimension_numbers = #tpu.dot_dimension_numbers<[1], [0], [0], [1], [0, 0, 1, 1], [], []>} : vector<8x64xbf16>, vector<64x384xbf16>, vector<8x384xf32> -> vector<8x384xf32>
    %276 = vector.extract_strided_slice %275 {offsets = [0, 0], sizes = [8, 256], strides = [1, 1]} : vector<8x384xf32> to vector<8x256xf32>
    %277 = vector.extract_strided_slice %275 {offsets = [0, 256], sizes = [8, 128], strides = [1, 1]} : vector<8x384xf32> to vector<8x128xf32>
    %278 = arith.truncf %260 : vector<8x64xf32> to vector<8x64xbf16>
    %c0_69 = arith.constant 0 : index
    %c640 = arith.constant 640 : index
    %279 = vector.load %arg5[%c0_69, %c640] : memref<64x896xbf16, #tpu.memory_space<vmem>>, vector<64x128xbf16>
    %cst_70 = arith.constant dense<0.000000e+00> : vector<8x128xf32>
    %280 = tpu.matmul %278, %279, %cst_70 {dimension_numbers = #tpu.dot_dimension_numbers<[1], [0], [0], [1], [0, 0, 1, 1], [], []>} : vector<8x64xbf16>, vector<64x128xbf16>, vector<8x128xf32> -> vector<8x128xf32>
    %281 = arith.addf %277, %280 : vector<8x128xf32>
    %282 = vector.extract_strided_slice %272 {offsets = [0, 0], sizes = [56, 256], strides = [1, 1]} : vector<56x384xf32> to vector<56x256xf32>
    %283 = vector.shape_cast %282 : vector<56x256xf32> to vector<7x8x256xf32>
    %284 = vector.shape_cast %276 : vector<8x256xf32> to vector<1x8x256xf32>
    %285 = vector.broadcast %284 : vector<1x8x256xf32> to vector<7x8x256xf32>
    %286 = arith.addf %283, %285 : vector<7x8x256xf32>
    %287 = vector.extract_strided_slice %286 {offsets = [0, 0, 0], sizes = [7, 8, 64], strides = [1, 1, 1]} : vector<7x8x256xf32> to vector<7x8x64xf32>
    %288 = arith.negf %287 : vector<7x8x64xf32>
    %289 = math.exp %288 : vector<7x8x64xf32>
    %cst_71 = arith.constant 1.000000e+00 : f32
    %290 = vector.broadcast %cst_71 : f32 to vector<7x8x64xf32>
    %291 = arith.addf %290, %289 : vector<7x8x64xf32>
    %292 = arith.divf %290, %291 : vector<7x8x64xf32>
    %293 = vector.extract_strided_slice %286 {offsets = [0, 0, 64], sizes = [7, 8, 64], strides = [1, 1, 1]} : vector<7x8x256xf32> to vector<7x8x64xf32>
    %294 = arith.negf %293 : vector<7x8x64xf32>
    %295 = math.exp %294 : vector<7x8x64xf32>
    %cst_72 = arith.constant 1.000000e+00 : f32
    %296 = vector.broadcast %cst_72 : f32 to vector<7x8x64xf32>
    %297 = arith.addf %296, %295 : vector<7x8x64xf32>
    %298 = arith.divf %296, %297 : vector<7x8x64xf32>
    %299 = vector.extract_strided_slice %286 {offsets = [0, 0, 128], sizes = [7, 8, 64], strides = [1, 1, 1]} : vector<7x8x256xf32> to vector<7x8x64xf32>
    %300 = math.tanh %299 : vector<7x8x64xf32>
    %301 = vector.extract_strided_slice %286 {offsets = [0, 0, 192], sizes = [7, 8, 64], strides = [1, 1, 1]} : vector<7x8x256xf32> to vector<7x8x64xf32>
    %302 = arith.negf %301 : vector<7x8x64xf32>
    %303 = math.exp %302 : vector<7x8x64xf32>
    %cst_73 = arith.constant 1.000000e+00 : f32
    %304 = vector.broadcast %cst_73 : f32 to vector<7x8x64xf32>
    %305 = arith.addf %304, %303 : vector<7x8x64xf32>
    %306 = arith.divf %304, %305 : vector<7x8x64xf32>
    %307 = vector.shape_cast %260 : vector<8x64xf32> to vector<1x8x64xf32>
    %308 = vector.broadcast %307 : vector<1x8x64xf32> to vector<7x8x64xf32>
    %309 = arith.mulf %298, %308 : vector<7x8x64xf32>
    %310 = arith.mulf %292, %300 : vector<7x8x64xf32>
    %311 = arith.addf %309, %310 : vector<7x8x64xf32>
    %312 = math.tanh %311 : vector<7x8x64xf32>
    %313 = arith.mulf %306, %312 : vector<7x8x64xf32>
    %314 = vector.shape_cast %313 : vector<7x8x64xf32> to vector<56x64xf32>
    %315 = arith.truncf %314 : vector<56x64xf32> to vector<56x64xbf16>
    %c0_74 = arith.constant 0 : index
    %c768 = arith.constant 768 : index
    %316 = vector.load %arg5[%c0_74, %c768] : memref<64x896xbf16, #tpu.memory_space<vmem>>, vector<64x128xbf16>
    %cst_75 = arith.constant dense<0.000000e+00> : vector<56x128xf32>
    %317 = tpu.matmul %315, %316, %cst_75 {dimension_numbers = #tpu.dot_dimension_numbers<[1], [0], [0], [1], [0, 0, 1, 1], [], []>} : vector<56x64xbf16>, vector<64x128xbf16>, vector<56x128xf32> -> vector<56x128xf32>
    %318 = vector.extract_strided_slice %272 {offsets = [0, 256], sizes = [56, 128], strides = [1, 1]} : vector<56x384xf32> to vector<56x128xf32>
    %319 = arith.addf %317, %318 : vector<56x128xf32>
    %320 = vector.shape_cast %319 : vector<56x128xf32> to vector<7x8x128xf32>
    %321 = vector.shape_cast %281 : vector<8x128xf32> to vector<1x8x128xf32>
    %322 = vector.broadcast %321 : vector<1x8x128xf32> to vector<7x8x128xf32>
    %323 = arith.addf %320, %322 : vector<7x8x128xf32>
    %324 = vector.shape_cast %323 : vector<7x8x128xf32> to vector<56x128xf32>
    %c0_76 = arith.constant 0 : index
    %c0_77 = arith.constant 0 : index
    %325 = vector.load %arg6[%c0_76, %c0_77] : memref<56x128xf32, #tpu.memory_space<vmem>>, vector<56x128xf32>
    tpu.vector_store %arg6[%c0_76, %c0_77], %324 {strides = array<i32>} : memref<56x128xf32, #tpu.memory_space<vmem>>, vector<56x128xf32>,
    return
  }
  func.func @transform_0(%arg0: i32) -> (i32, i32) {
    %c0_i32 = arith.constant 0 : i32
    %c0_i32_0 = arith.constant 0 : i32
    %c0_i32_1 = arith.constant 0 : i32
    return %c0_i32, %c0_i32_0 : i32, i32
  }
  func.func @transform_1(%arg0: i32) -> (i32, i32) {
    %c0_i32 = arith.constant 0 : i32
    %c0_i32_0 = arith.constant 0 : i32
    %c0_i32_1 = arith.constant 0 : i32
    return %c0_i32, %c0_i32_0 : i32, i32
  }
  func.func @transform_2(%arg0: i32) -> (i32, i32) {
    %c0_i32 = arith.constant 0 : i32
    %c0_i32_0 = arith.constant 0 : i32
    %c0_i32_1 = arith.constant 0 : i32
    return %c0_i32, %c0_i32_0 : i32, i32
  }
  func.func @transform_3(%arg0: i32) -> (i32, i32) {
    %c0_i32 = arith.constant 0 : i32
    %c0_i32_0 = arith.constant 0 : i32
    %c0_i32_1 = arith.constant 0 : i32
    return %c0_i32, %c0_i32_0 : i32, i32
  }
  func.func @transform_4(%arg0: i32) -> (i32, i32) {
    %c0_i32 = arith.constant 0 : i32
    %c0_i32_0 = arith.constant 0 : i32
    %c0_i32_1 = arith.constant 0 : i32
    return %c0_i32, %c0_i32_0 : i32, i32
  }
  func.func @transform_5(%arg0: i32) -> (i32, i32) {
    %c0_i32 = arith.constant 0 : i32
    %c0_i32_0 = arith.constant 0 : i32
    %c0_i32_1 = arith.constant 0 : i32
    return %c0_i32, %c0_i32_0 : i32, i32
  }
}

</mosaic_0001>

<llo_original>
// kernel: tpu_custom_call.1
$region0: #{tpu_custom_call.1}
  #allocation0 [shape = 'u32[]', space=smem, size = 0x4, offset = 0x4, fixed_abs, tag = 'smem constant byte address 0x4 - core index']
  #allocation1 [shape = 'u32[144,128]{1,0:T(1,128)}', space=vmem, size = 0x12000, scoped, tag = 'internal scratch']
  #allocation2 [shape = 'f32[8,8,256]{2,1,0:T(8,128)}', space=vmem, size = 0x10000, scoped, tag = 'scratch operand']
  %s0 = inlined_call_operand.vmem [shape: s32[64,1], index: 0, kind: input, shape index: {}]
  %s1 = inlined_call_operand.vmem [shape: s32[56,1], index: 1, kind: input, shape index: {}]
  %s2 = inlined_call_operand.vmem [shape: bf16[128,256], index: 2, kind: input, shape index: {}]
  %s3 = inlined_call_operand.hbm [shape: bf16[128,384], index: 3, kind: input, shape index: {}]
  %s4 = inlined_call_operand.hbm [shape: bf16[64,896], index: 4, kind: input, shape index: {}]
  %s5 = inlined_call_operand.hbm [shape: f32[56,128], index: 5, kind: output, shape index: {}]
  %s6 = sld [smem:[#allocation0]]
  $region38: #{tpu_custom_call.1} parent=0
    _
  %s8 = ssub.s32 1, %s6
  %s9 = scalar_select 0, %s8, %s6
  $region1: #{tpu_custom_call.1} parent=0
    #allocation3 [shape = 'u8[98304]{0}', space=vmem, size = 0x18000, scoped, tag = 'input window, operand 3, single buffered']
    #allocation4 [shape = 's32[1]{0}', space=sflag, size = 0x4, scoped, tag = 'scoped memory for tpu_custom_call.1']
    #allocation5 [shape = 's32[1]{0}', space=sflag, size = 0x4, scoped, tag = 'scoped memory for tpu_custom_call.1']
    #allocation6 [shape = 'u8[114688]{0}', space=vmem, size = 0x1c000, scoped, tag = 'input window, operand 4, single buffered']
    #allocation7 [shape = 's32[1]{0}', space=sflag, size = 0x4, scoped, tag = 'scoped memory for tpu_custom_call.1']
    #allocation8 [shape = 'u8[28672]{0}', space=vmem, size = 0x7000, scoped, tag = 'output window, operand 0, single buffered']
    %10 = vsyncpa [#allocation4], 0
    %11 = vsyncpa [#allocation7], 0
    %12 = vsyncpa [#allocation5], 0
    // Predicated region
    $region2: #{tpu_custom_call.1} parent=1 // pred_check
      _
    $region3: #{tpu_custom_call.1} parent=1 // pred_check_branch
      %14 = sbr.rel (0) target = $region5
    $region4: #{tpu_custom_call.1} parent=1 // pred_region
      _
    $region5: #{tpu_custom_call.1} parent=1 // pred_fallthru
      _
    // Predicated region
    $region6: #{tpu_custom_call.1} parent=1 // pred_check
      _
    $region7: #{tpu_custom_call.1} parent=1 // pred_check_branch
      %16 = sbr.rel (0) target = $region9
    $region8: #{tpu_custom_call.1} parent=1 // pred_region
      _
    $region9: #{tpu_custom_call.1} parent=1 // pred_fallthru
      _
    // Predicated region
    $region10: #{tpu_custom_call.1} parent=1 // pred_check
      _
    $region11: #{tpu_custom_call.1} parent=1 // pred_check_branch
      %18 = sbr.rel (0) target = $region13
    $region12: #{tpu_custom_call.1} parent=1 // pred_region
      _
    $region13: #{tpu_custom_call.1} parent=1 // pred_fallthru
      _
    // Predicated region
    $region14: #{tpu_custom_call.1} parent=1 // pred_check
      _
    $region15: #{tpu_custom_call.1} parent=1 // pred_check_branch
      %20 = sbr.rel (0) target = $region17
    $region16: #{tpu_custom_call.1} parent=1 // pred_region
      %s22 = ssub.s32 3072, 3072
      %23 = vsyncadd [#allocation4], %s22
      %s24 = sshll.u32 [#allocation3], 4
      %s25 = int_to_ptr.vmem [resolvable:$true] %s24
      %30 = dma.hbm_to_vmem [thread:$0]  %s3, 3072, %s25, [#allocation4], 192, 192, 12
    $region17: #{tpu_custom_call.1} parent=1 // pred_fallthru
      _
    // Predicated region
    $region18: #{tpu_custom_call.1} parent=1 // pred_check
      _
    $region19: #{tpu_custom_call.1} parent=1 // pred_check_branch
      %32 = sbr.rel (0) target = $region21
    $region20: #{tpu_custom_call.1} parent=1 // pred_region
      %s34 = ssub.s32 3584, 3584
      %35 = vsyncadd [#allocation7], %s34
      %s36 = sshll.u32 [#allocation6], 4
      %s37 = int_to_ptr.vmem [resolvable:$true] %s36
      %42 = dma.hbm_to_vmem [thread:$0]  %s4, 3584, %s37, [#allocation7], 448, 448, 28
    $region21: #{tpu_custom_call.1} parent=1 // pred_fallthru
      _
    // Predicated region
    $region22: #{tpu_custom_call.1} parent=1 // pred_check
      _
    $region23: #{tpu_custom_call.1} parent=1 // pred_check_branch
      %44 = sbr.rel (0) target = $region25
    $region24: #{tpu_custom_call.1} parent=1 // pred_region
      %45 = dma.done [#allocation4], 3072
    $region25: #{tpu_custom_call.1} parent=1 // pred_fallthru
      _
    // Predicated region
    $region26: #{tpu_custom_call.1} parent=1 // pred_check
      _
    $region27: #{tpu_custom_call.1} parent=1 // pred_check_branch
      %47 = sbr.rel (0) target = $region29
    $region28: #{tpu_custom_call.1} parent=1 // pred_region
      %48 = dma.done [#allocation7], 3584
    $region29: #{tpu_custom_call.1} parent=1 // pred_fallthru
      _
    %v50 = vld [vmem:[%s0] sm:$0xff]
    %v51 = vld [vmem:[%s0 + $0x8] sm:$0xff]
    %v52 = vld [vmem:[%s0 + $0x10] sm:$0xff]
    %v53 = vld [vmem:[%s0 + $0x18] sm:$0xff]
    %v54 = vld [vmem:[%s0 + $0x20] sm:$0xff]
    %v55 = vld [vmem:[%s0 + $0x28] sm:$0xff]
    %v56 = vld [vmem:[%s0 + $0x30] sm:$0xff]
    %v57 = vld [vmem:[%s0 + $0x38] sm:$0xff]
    %v58 = vlaneseq
    %v59 = vand.u32 %v58, 127
    %60 = vset.pattern.permute.xlu0 0
    %61 = vperm.xlu0 %60, %v50
    %v62 = vpop.permute.xlu0 %61
    %63 = vset.pattern.permute.xlu0 0
    %64 = vperm.xlu0 %63, %v51
    %v65 = vpop.permute.xlu0 %64
    %66 = vset.pattern.permute.xlu0 0
    %67 = vperm.xlu0 %66, %v52
    %v68 = vpop.permute.xlu0 %67
    %69 = vset.pattern.permute.xlu0 0
    %70 = vperm.xlu0 %69, %v53
    %v71 = vpop.permute.xlu0 %70
    %72 = vset.pattern.permute.xlu0 0
    %73 = vperm.xlu0 %72, %v54
    %v74 = vpop.permute.xlu0 %73
    %75 = vset.pattern.permute.xlu0 0
    %76 = vperm.xlu0 %75, %v55
    %v77 = vpop.permute.xlu0 %76
    %78 = vset.pattern.permute.xlu0 0
    %79 = vperm.xlu0 %78, %v56
    %v80 = vpop.permute.xlu0 %79
    %81 = vset.pattern.permute.xlu0 0
    %82 = vperm.xlu0 %81, %v57
    %v83 = vpop.permute.xlu0 %82
    %vm84 = vcmp.eq.s32.totalorder %v62, %v59
    %vm85 = vcmp.eq.s32.totalorder %v65, %v59
    %vm86 = vcmp.eq.s32.totalorder %v68, %v59
    %vm87 = vcmp.eq.s32.totalorder %v71, %v59
    %vm88 = vcmp.eq.s32.totalorder %v74, %v59
    %vm89 = vcmp.eq.s32.totalorder %v77, %v59
    %vm90 = vcmp.eq.s32.totalorder %v80, %v59
    %vm91 = vcmp.eq.s32.totalorder %v83, %v59
    %v92 = vsel %vm84, 1.0, 0.0
    %v93 = vsel %vm85, 1.0, 0.0
    %v94 = vsel %vm86, 1.0, 0.0
    %v95 = vsel %vm87, 1.0, 0.0
    %v96 = vsel %vm88, 1.0, 0.0
    %v97 = vsel %vm89, 1.0, 0.0
    %v98 = vsel %vm90, 1.0, 0.0
    %v99 = vsel %vm91, 1.0, 0.0
    %v100 = vpack.c.bf16 %v93, %v92
    %v101 = vpack.c.bf16 %v95, %v94
    %v102 = vpack.c.bf16 %v97, %v96
    %v103 = vpack.c.bf16 %v99, %v98
    %v104 = vld [vmem:[%s2] sm:$0xff]
    %v105 = vld [vmem:[%s2 + $0x8] sm:$0xff]
    %v106 = vld [vmem:[%s2 + $0x10] sm:$0xff]
    %v107 = vld [vmem:[%s2 + $0x18] sm:$0xff]
    %v108 = vld [vmem:[%s2 + $0x20] sm:$0xff]
    %v109 = vld [vmem:[%s2 + $0x28] sm:$0xff]
    %v110 = vld [vmem:[%s2 + $0x30] sm:$0xff]
    %v111 = vld [vmem:[%s2 + $0x38] sm:$0xff]
    %v112 = vld [vmem:[%s2 + $0x40] sm:$0xff]
    %v113 = vld [vmem:[%s2 + $0x48] sm:$0xff]
    %v114 = vld [vmem:[%s2 + $0x50] sm:$0xff]
    %v115 = vld [vmem:[%s2 + $0x58] sm:$0xff]
    %v116 = vld [vmem:[%s2 + $0x60] sm:$0xff]
    %v117 = vld [vmem:[%s2 + $0x68] sm:$0xff]
    %v118 = vld [vmem:[%s2 + $0x70] sm:$0xff]
    %v119 = vld [vmem:[%s2 + $0x78] sm:$0xff]
    %v136 = vunpack.c.l.b16 %v104
    %v137 = vunpack.c.h.b16 %v104
    %v138 = vunpack.c.l.b16 %v105
    %v139 = vunpack.c.h.b16 %v105
    %v140 = vunpack.c.l.b16 %v106
    %v141 = vunpack.c.h.b16 %v106
    %v142 = vunpack.c.l.b16 %v107
    %v143 = vunpack.c.h.b16 %v107
    %v144 = vunpack.c.l.b16 %v108
    %v145 = vunpack.c.h.b16 %v108
    %v146 = vunpack.c.l.b16 %v109
    %v147 = vunpack.c.h.b16 %v109
    %v148 = vunpack.c.l.b16 %v110
    %v149 = vunpack.c.h.b16 %v110
    %v150 = vunpack.c.l.b16 %v111
    %v151 = vunpack.c.h.b16 %v111
    %v152 = vunpack.c.l.b16 %v112
    %v153 = vunpack.c.h.b16 %v112
    %v154 = vunpack.c.l.b16 %v113
    %v155 = vunpack.c.h.b16 %v113
    %v156 = vunpack.c.l.b16 %v114
    %v157 = vunpack.c.h.b16 %v114
    %v158 = vunpack.c.l.b16 %v115
    %v159 = vunpack.c.h.b16 %v115
    %v160 = vunpack.c.l.b16 %v116
    %v161 = vunpack.c.h.b16 %v116
    %v162 = vunpack.c.l.b16 %v117
    %v163 = vunpack.c.h.b16 %v117
    %v164 = vunpack.c.l.b16 %v118
    %v165 = vunpack.c.h.b16 %v118
    %v166 = vunpack.c.l.b16 %v119
    %v167 = vunpack.c.h.b16 %v119
    %v168 = vpack.c.b16 %v138, %v136
    %v169 = vpack.c.b16 %v139, %v137
    %v170 = vpack.c.b16 %v142, %v140
    %v171 = vpack.c.b16 %v143, %v141
    %v172 = vpack.c.b16 %v146, %v144
    %v173 = vpack.c.b16 %v147, %v145
    %v174 = vpack.c.b16 %v150, %v148
    %v175 = vpack.c.b16 %v151, %v149
    %v176 = vpack.c.b16 %v154, %v152
    %v177 = vpack.c.b16 %v155, %v153
    %v178 = vpack.c.b16 %v158, %v156
    %v179 = vpack.c.b16 %v159, %v157
    %v180 = vpack.c.b16 %v162, %v160
    %v181 = vpack.c.b16 %v163, %v161
    %v182 = vpack.c.b16 %v166, %v164
    %v183 = vpack.c.b16 %v167, %v165
    %200 = vmatprep.subr.bf16.mxu0 %v169
    %201 = vmatpush1.bf16.msra.mxu0 %v168
    %202 = vmatprep.subr.bf16.mxu0 %v171
    %203 = vmatpush1.bf16.msra.mxu0 %v170
    %204 = vmatprep.subr.bf16.mxu0 %v173
    %205 = vmatpush1.bf16.msra.mxu0 %v172
    %206 = vmatprep.subr.bf16.mxu0 %v175
    %207 = vmatpush1.bf16.msra.mxu0 %v174
    %208 = vmatprep.subr.bf16.mxu0 %v177
    %209 = vmatpush1.bf16.msra.mxu0 %v176
    %210 = vmatprep.subr.bf16.mxu0 %v179
    %211 = vmatpush1.bf16.msra.mxu0 %v178
    %212 = vmatprep.subr.bf16.mxu0 %v181
    %213 = vmatpush1.bf16.msra.mxu0 %v180
    %214 = vmatprep.subr.bf16.mxu0 %v183
    %215 = vmatpush1.bf16.msra.mxu0 %v182
    %216 = vmatprep.subr.bf16.mxu0 0
    %217 = vmatpush1.bf16.msra.mxu0 0
    %218 = vmatprep.subr.bf16.mxu0 0
    %219 = vmatpush1.bf16.msra.mxu0 0
    %220 = vmatprep.subr.bf16.mxu0 0
    %221 = vmatpush1.bf16.msra.mxu0 0
    %222 = vmatprep.subr.bf16.mxu0 0
    %223 = vmatpush1.bf16.msra.mxu0 0
    %224 = vmatprep.subr.bf16.mxu0 0
    %225 = vmatpush1.bf16.msra.mxu0 0
    %226 = vmatprep.subr.bf16.mxu0 0
    %227 = vmatpush1.bf16.msra.mxu0 0
    %228 = vmatprep.subr.bf16.mxu0 0
    %229 = vmatpush1.bf16.msra.mxu0 0
    %230 = vmatprep.subr.bf16.mxu0 0
    %231 = vmatpush1.bf16.msra.mxu0 0
    %232 = vmatprep.mubr.bf16.mxu0 0
    %233 = vmatmul.mubr.bf16.gmra.mrb[0].mxu0 %v100
    %v234 = vpop.f32.mrb[0].mxu0
    %v235 = vadd.f32 0.0, %v234
    %v236 = vpop.f32.mrb[0].mxu0
    %v237 = vadd.f32 0.0, %v236
    %v238 = vpop.f32.mrb[0].mxu0
    %v239 = vadd.f32 0.0, %v238
    %v240 = vpop.f32.mrb[0].mxu0
    %v241 = vadd.f32 0.0, %v240
    %242 = vmatprep.mubr.bf16.mxu0 0
    %243 = vmatmul.mubr.bf16.gmra.mrb[0].mxu0 %v101
    %v244 = vpop.f32.mrb[0].mxu0
    %v245 = vadd.f32 0.0, %v244
    %v246 = vpop.f32.mrb[0].mxu0
    %v247 = vadd.f32 0.0, %v246
    %v248 = vpop.f32.mrb[0].mxu0
    %v249 = vadd.f32 0.0, %v248
    %v250 = vpop.f32.mrb[0].mxu0
    %v251 = vadd.f32 0.0, %v250
    %252 = vmatprep.mubr.bf16.mxu0 0
    %253 = vmatmul.mubr.bf16.gmra.mrb[0].mxu0 %v102
    %v254 = vpop.f32.mrb[0].mxu0
    %v255 = vadd.f32 0.0, %v254
    %v256 = vpop.f32.mrb[0].mxu0
    %v257 = vadd.f32 0.0, %v256
    %v258 = vpop.f32.mrb[0].mxu0
    %v259 = vadd.f32 0.0, %v258
    %v260 = vpop.f32.mrb[0].mxu0
    %v261 = vadd.f32 0.0, %v260
    %262 = vmatprep.mubr.bf16.mxu0 0
    %263 = vmatmul.mubr.bf16.gmra.mrb[0].mxu0 %v103
    %v264 = vpop.f32.mrb[0].mxu0
    %v265 = vadd.f32 0.0, %v264
    %v266 = vpop.f32.mrb[0].mxu0
    %v267 = vadd.f32 0.0, %v266
    %v268 = vpop.f32.mrb[0].mxu0
    %v269 = vadd.f32 0.0, %v268
    %v270 = vpop.f32.mrb[0].mxu0
    %v271 = vadd.f32 0.0, %v270
    %272 = vdwg.mxu0
    %273 = vst [vmem:[#allocation2] sm:$0xff] %v235
    %274 = vst [vmem:[#allocation2 + $0x8] sm:$0xff] %v237
    %275 = vst [vmem:[#allocation2 + $0x10] sm:$0xff] %v239
    %276 = vst [vmem:[#allocation2 + $0x18] sm:$0xff] %v241
    %277 = vst [vmem:[#allocation2 + $0x20] sm:$0xff] %v245
    %278 = vst [vmem:[#allocation2 + $0x28] sm:$0xff] %v247
    %279 = vst [vmem:[#allocation2 + $0x30] sm:$0xff] %v249
    %280 = vst [vmem:[#allocation2 + $0x38] sm:$0xff] %v251
    %281 = vst [vmem:[#allocation2 + $0x40] sm:$0xff] %v255
    %282 = vst [vmem:[#allocation2 + $0x48] sm:$0xff] %v257
    %283 = vst [vmem:[#allocation2 + $0x50] sm:$0xff] %v259
    %284 = vst [vmem:[#allocation2 + $0x58] sm:$0xff] %v261
    %285 = vst [vmem:[#allocation2 + $0x60] sm:$0xff] %v265
    %286 = vst [vmem:[#allocation2 + $0x68] sm:$0xff] %v267
    %287 = vst [vmem:[#allocation2 + $0x70] sm:$0xff] %v269
    %288 = vst [vmem:[#allocation2 + $0x78] sm:$0xff] %v271
    %v289 = vld [vmem:[#allocation6] sm:$0xff]
    %v290 = vld [vmem:[#allocation6 + $0x1c] sm:$0xff]
    %v291 = vld [vmem:[#allocation6 + $0x38] sm:$0xff]
    %v292 = vld [vmem:[#allocation6 + $0x54] sm:$0xff]
    %v293 = vld [vmem:[#allocation6 + $0x70] sm:$0xff]
    %v294 = vld [vmem:[#allocation6 + $0x8c] sm:$0xff]
    %v295 = vld [vmem:[#allocation6 + $0xa8] sm:$0xff]
    %v296 = vld [vmem:[#allocation6 + $0xc4] sm:$0xff]
    %v297 = vld [vmem:[#allocation2] sm:$0xff]
    %v298 = vld [vmem:[#allocation2 + $0x8] sm:$0xff]
    %v307 = vunpack.c.l.b16 %v289
    %v308 = vunpack.c.h.b16 %v289
    %v309 = vunpack.c.l.b16 %v290
    %v310 = vunpack.c.h.b16 %v290
    %v311 = vunpack.c.l.b16 %v291
    %v312 = vunpack.c.h.b16 %v291
    %v313 = vunpack.c.l.b16 %v292
    %v314 = vunpack.c.h.b16 %v292
    %v315 = vunpack.c.l.b16 %v293
    %v316 = vunpack.c.h.b16 %v293
    %v317 = vunpack.c.l.b16 %v294
    %v318 = vunpack.c.h.b16 %v294
    %v319 = vunpack.c.l.b16 %v295
    %v320 = vunpack.c.h.b16 %v295
    %v321 = vunpack.c.l.b16 %v296
    %v322 = vunpack.c.h.b16 %v296
    %v323 = vpack.c.b16 %v309, %v307
    %v324 = vpack.c.b16 %v310, %v308
    %v325 = vpack.c.b16 %v313, %v311
    %v326 = vpack.c.b16 %v314, %v312
    %v327 = vpack.c.b16 %v317, %v315
    %v328 = vpack.c.b16 %v318, %v316
    %v329 = vpack.c.b16 %v321, %v319
    %v330 = vpack.c.b16 %v322, %v320
    %vm339 = vcmask 523264
    %v341 = vsel %vm339, 0, 0
    %343 = vmatprep.subr.bf16.mxu0 %v324
    %344 = vmatpush1.bf16.msra.mxu0 %v323
    %345 = vmatprep.subr.bf16.mxu0 %v326
    %346 = vmatpush1.bf16.msra.mxu0 %v325
    %347 = vmatprep.subr.bf16.mxu0 %v328
    %348 = vmatpush1.bf16.msra.mxu0 %v327
    %349 = vmatprep.subr.bf16.mxu0 %v330
    %350 = vmatpush1.bf16.msra.mxu0 %v329
    %351 = vmatprep.subr.bf16.mxu0 0
    %352 = vmatpush1.bf16.msra.mxu0 0
    %353 = vmatprep.subr.bf16.mxu0 0
    %354 = vmatpush1.bf16.msra.mxu0 0
    %355 = vmatprep.subr.bf16.mxu0 0
    %356 = vmatpush1.bf16.msra.mxu0 0
    %357 = vmatprep.subr.bf16.mxu0 0
    %358 = vmatpush1.bf16.msra.mxu0 0
    %359 = vmatprep.subr.bf16.mxu0 0
    %360 = vmatpush1.bf16.msra.mxu0 0
    %361 = vmatprep.subr.bf16.mxu0 0
    %362 = vmatpush1.bf16.msra.mxu0 0
    %363 = vmatprep.subr.bf16.mxu0 0
    %364 = vmatpush1.bf16.msra.mxu0 0
    %365 = vmatprep.subr.bf16.mxu0 0
    %366 = vmatpush1.bf16.msra.mxu0 0
    %367 = vmatprep.subr.bf16.mxu0 0
    %368 = vmatpush1.bf16.msra.mxu0 0
    %369 = vmatprep.subr.bf16.mxu0 0
    %370 = vmatpush1.bf16.msra.mxu0 0
    %371 = vmatprep.subr.bf16.mxu0 0
    %372 = vmatpush1.bf16.msra.mxu0 0
    %373 = vmatprep.subr.bf16.mxu0 0
    %374 = vmatpush1.bf16.msra.mxu0 0
    %375 = vmatprep.mubr.bf16.mxu0 0
    %376 = vmatmul.mubr.bf16.gmra.mrb[0].mxu0 %v341
    %v377 = vpop.f32.mrb[0].mxu0
    %v378 = vadd.f32 0.0, %v377
    %v379 = vpop.f32.mrb[0].mxu0
    %v380 = vadd.f32 0.0, %v379
    %v381 = vpop.f32.mrb[0].mxu0
    %v382 = vpop.f32.mrb[0].mxu0
    %383 = vdwg.mxu0
    %v384 = vadd.f32 %v297, %v378
    %v385 = vadd.f32 %v298, %v380
    %v386 = vxor.u32 %v384, 2147483648
    %v387 = vmul.f32 %v386, 1.442695
    %v388 = vpow.pop %v387
    %v389 = vadd.f32 %v388, 1.0
    %v390 = vrcp.pop %v389
    %v391 = vmul.f32 1.0, %v390
    %v392 = vtanh.pop %v385
    %v393 = vxor.u32 %v385, 2147483648
    %v394 = vmul.f32 %v393, 1.442695
    %v395 = vpow.pop %v394
    %v396 = vadd.f32 %v395, 1.0
    %v397 = vrcp.pop %v396
    %v398 = vmul.f32 1.0, %v397
    %v399 = vmul.f32 %v391, 0.0
    %v400 = vmul.f32 %v391, %v392
    %402 = vrot.lane.b32.xlu0 %v400, 64
    %v403 = vpop.permute.xlu0 %402
    %v405 = vadd.f32 %v399, %v403
    %v406 = vtanh.pop %v405
    %v407 = vmul.f32 %v398, %v406
    %s408 = scalar_lea.vmem [#allocation2], 16
    %v409 = vld [vmem:[%s408] sm:$0xff]
    %v410 = vld [vmem:[%s408 + $0x8] sm:$0xff]
    %v411 = vpack.c.bf16 %v407, %v407
    %413 = vrot.lane.b32.xlu0 %v411, 64
    %v414 = vpop.permute.xlu0 %413
    %v416 = vsel %vm339, %v414, 0
    %418 = vmatprep.subr.bf16.mxu0 %v324
    %419 = vmatpush1.bf16.msra.mxu0 %v323
    %420 = vmatprep.subr.bf16.mxu0 %v326
    %421 = vmatpush1.bf16.msra.mxu0 %v325
    %422 = vmatprep.subr.bf16.mxu0 %v328
    %423 = vmatpush1.bf16.msra.mxu0 %v327
    %424 = vmatprep.subr.bf16.mxu0 %v330
    %425 = vmatpush1.bf16.msra.mxu0 %v329
    %426 = vmatprep.subr.bf16.mxu0 0
    %427 = vmatpush1.bf16.msra.mxu0 0
    %428 = vmatprep.subr.bf16.mxu0 0
    %429 = vmatpush1.bf16.msra.mxu0 0
    %430 = vmatprep.subr.bf16.mxu0 0
    %431 = vmatpush1.bf16.msra.mxu0 0
    %432 = vmatprep.subr.bf16.mxu0 0
    %433 = vmatpush1.bf16.msra.mxu0 0
    %434 = vmatprep.subr.bf16.mxu0 0
    %435 = vmatpush1.bf16.msra.mxu0 0
    %436 = vmatprep.subr.bf16.mxu0 0
    %437 = vmatpush1.bf16.msra.mxu0 0
    %438 = vmatprep.subr.bf16.mxu0 0
    %439 = vmatpush1.bf16.msra.mxu0 0
    %440 = vmatprep.subr.bf16.mxu0 0
    %441 = vmatpush1.bf16.msra.mxu0 0
    %442 = vmatprep.subr.bf16.mxu0 0
    %443 = vmatpush1.bf16.msra.mxu0 0
    %444 = vmatprep.subr.bf16.mxu0 0
    %445 = vmatpush1.bf16.msra.mxu0 0
    %446 = vmatprep.subr.bf16.mxu0 0
    %447 = vmatpush1.bf16.msra.mxu0 0
    %448 = vmatprep.subr.bf16.mxu0 0
    %449 = vmatpush1.bf16.msra.mxu0 0
    %450 = vmatprep.mubr.bf16.mxu0 0
    %451 = vmatmul.mubr.bf16.gmra.mrb[0].mxu0 %v416
    %v452 = vpop.f32.mrb[0].mxu0
    %v453 = vadd.f32 0.0, %v452
    %v454 = vpop.f32.mrb[0].mxu0
    %v455 = vadd.f32 0.0, %v454
    %v456 = vpop.f32.mrb[0].mxu0
    %v457 = vpop.f32.mrb[0].mxu0
    %458 = vdwg.mxu0
    %v459 = vadd.f32 %v409, %v453
    %v460 = vadd.f32 %v410, %v455
    %v461 = vxor.u32 %v459, 2147483648
    %v462 = vmul.f32 %v461, 1.442695
    %v463 = vpow.pop %v462
    %v464 = vadd.f32 %v463, 1.0
    %v465 = vrcp.pop %v464
    %v466 = vmul.f32 1.0, %v465
    %v467 = vtanh.pop %v460
    %v468 = vxor.u32 %v460, 2147483648
    %v469 = vmul.f32 %v468, 1.442695
    %v470 = vpow.pop %v469
    %v471 = vadd.f32 %v470, 1.0
    %v472 = vrcp.pop %v471
    %v473 = vmul.f32 1.0, %v472
    %v474 = vmul.f32 %v466, %v405
    %v475 = vmul.f32 %v466, %v467
    %477 = vrot.lane.b32.xlu0 %v475, 64
    %v478 = vpop.permute.xlu0 %477
    %v480 = vadd.f32 %v474, %v478
    %v481 = vtanh.pop %v480
    %v482 = vmul.f32 %v473, %v481
    %s483 = scalar_lea.vmem [#allocation2], 32
    %v484 = vld [vmem:[%s483] sm:$0xff]
    %v485 = vld [vmem:[%s483 + $0x8] sm:$0xff]
    %v486 = vpack.c.bf16 %v482, %v482
    %488 = vrot.lane.b32.xlu0 %v486, 64
    %v489 = vpop.permute.xlu0 %488
    %v491 = vsel %vm339, %v489, 0
    %493 = vmatprep.subr.bf16.mxu0 %v324
    %494 = vmatpush1.bf16.msra.mxu0 %v323
    %495 = vmatprep.subr.bf16.mxu0 %v326
    %496 = vmatpush1.bf16.msra.mxu0 %v325
    %497 = vmatprep.subr.bf16.mxu0 %v328
    %498 = vmatpush1.bf16.msra.mxu0 %v327
    %499 = vmatprep.subr.bf16.mxu0 %v330
    %500 = vmatpush1.bf16.msra.mxu0 %v329
    %501 = vmatprep.subr.bf16.mxu0 0
    %502 = vmatpush1.bf16.msra.mxu0 0
    %503 = vmatprep.subr.bf16.mxu0 0
    %504 = vmatpush1.bf16.msra.mxu0 0
    %505 = vmatprep.subr.bf16.mxu0 0
    %506 = vmatpush1.bf16.msra.mxu0 0
    %507 = vmatprep.subr.bf16.mxu0 0
    %508 = vmatpush1.bf16.msra.mxu0 0
    %509 = vmatprep.subr.bf16.mxu0 0
    %510 = vmatpush1.bf16.msra.mxu0 0
    %511 = vmatprep.subr.bf16.mxu0 0
    %512 = vmatpush1.bf16.msra.mxu0 0
    %513 = vmatprep.subr.bf16.mxu0 0
    %514 = vmatpush1.bf16.msra.mxu0 0
    %515 = vmatprep.subr.bf16.mxu0 0
    %516 = vmatpush1.bf16.msra.mxu0 0
    %517 = vmatprep.subr.bf16.mxu0 0
    %518 = vmatpush1.bf16.msra.mxu0 0
    %519 = vmatprep.subr.bf16.mxu0 0
    %520 = vmatpush1.bf16.msra.mxu0 0
    %521 = vmatprep.subr.bf16.mxu0 0
    %522 = vmatpush1.bf16.msra.mxu0 0
    %523 = vmatprep.subr.bf16.mxu0 0
    %524 = vmatpush1.bf16.msra.mxu0 0
    %525 = vmatprep.mubr.bf16.mxu0 0
    %526 = vmatmul.mubr.bf16.gmra.mrb[0].mxu0 %v491
    %v527 = vpop.f32.mrb[0].mxu0
    %v528 = vadd.f32 0.0, %v527
    %v529 = vpop.f32.mrb[0].mxu0
    %v530 = vadd.f32 0.0, %v529
    %v531 = vpop.f32.mrb[0].mxu0
    %v532 = vpop.f32.mrb[0].mxu0
    %533 = vdwg.mxu0
    %v534 = vadd.f32 %v484, %v528
    %v535 = vadd.f32 %v485, %v530
    %v536 = vxor.u32 %v534, 2147483648
    %v537 = vmul.f32 %v536, 1.442695
    %v538 = vpow.pop %v537
    %v539 = vadd.f32 %v538, 1.0
    %v540 = vrcp.pop %v539
    %v541 = vmul.f32 1.0, %v540
    %v542 = vtanh.pop %v535
    %v543 = vxor.u32 %v535, 2147483648
    %v544 = vmul.f32 %v543, 1.442695
    %v545 = vpow.pop %v544
    %v546 = vadd.f32 %v545, 1.0
    %v547 = vrcp.pop %v546
    %v548 = vmul.f32 1.0, %v547
    %v549 = vmul.f32 %v541, %v480
    %v550 = vmul.f32 %v541, %v542
    %552 = vrot.lane.b32.xlu0 %v550, 64
    %v553 = vpop.permute.xlu0 %552
    %v555 = vadd.f32 %v549, %v553
    %v556 = vtanh.pop %v555
    %v557 = vmul.f32 %v548, %v556
    %s558 = scalar_lea.vmem [#allocation2], 48
    %v559 = vld [vmem:[%s558] sm:$0xff]
    %v560 = vld [vmem:[%s558 + $0x8] sm:$0xff]
    %v561 = vpack.c.bf16 %v557, %v557
    %563 = vrot.lane.b32.xlu0 %v561, 64
    %v564 = vpop.permute.xlu0 %563
    %v566 = vsel %vm339, %v564, 0
    %568 = vmatprep.subr.bf16.mxu0 %v324
    %569 = vmatpush1.bf16.msra.mxu0 %v323
    %570 = vmatprep.subr.bf16.mxu0 %v326
    %571 = vmatpush1.bf16.msra.mxu0 %v325
    %572 = vmatprep.subr.bf16.mxu0 %v328
    %573 = vmatpush1.bf16.msra.mxu0 %v327
    %574 = vmatprep.subr.bf16.mxu0 %v330
    %575 = vmatpush1.bf16.msra.mxu0 %v329
    %576 = vmatprep.subr.bf16.mxu0 0
    %577 = vmatpush1.bf16.msra.mxu0 0
    %578 = vmatprep.subr.bf16.mxu0 0
    %579 = vmatpush1.bf16.msra.mxu0 0
    %580 = vmatprep.subr.bf16.mxu0 0
    %581 = vmatpush1.bf16.msra.mxu0 0
    %582 = vmatprep.subr.bf16.mxu0 0
    %583 = vmatpush1.bf16.msra.mxu0 0
    %584 = vmatprep.subr.bf16.mxu0 0
    %585 = vmatpush1.bf16.msra.mxu0 0
    %586 = vmatprep.subr.bf16.mxu0 0
    %587 = vmatpush1.bf16.msra.mxu0 0
    %588 = vmatprep.subr.bf16.mxu0 0
    %589 = vmatpush1.bf16.msra.mxu0 0
    %590 = vmatprep.subr.bf16.mxu0 0
    %591 = vmatpush1.bf16.msra.mxu0 0
    %592 = vmatprep.subr.bf16.mxu0 0
    %593 = vmatpush1.bf16.msra.mxu0 0
    %594 = vmatprep.subr.bf16.mxu0 0
    %595 = vmatpush1.bf16.msra.mxu0 0
    %596 = vmatprep.subr.bf16.mxu0 0
    %597 = vmatpush1.bf16.msra.mxu0 0
    %598 = vmatprep.subr.bf16.mxu0 0
    %599 = vmatpush1.bf16.msra.mxu0 0
    %600 = vmatprep.mubr.bf16.mxu0 0
    %601 = vmatmul.mubr.bf16.gmra.mrb[0].mxu0 %v566
    %v602 = vpop.f32.mrb[0].mxu0
    %v603 = vadd.f32 0.0, %v602
    %v604 = vpop.f32.mrb[0].mxu0
    %v605 = vadd.f32 0.0, %v604
    %v606 = vpop.f32.mrb[0].mxu0
    %v607 = vpop.f32.mrb[0].mxu0
    %608 = vdwg.mxu0
    %v609 = vadd.f32 %v559, %v603
    %v610 = vadd.f32 %v560, %v605
    %v611 = vxor.u32 %v609, 2147483648
    %v612 = vmul.f32 %v611, 1.442695
    %v613 = vpow.pop %v612
    %v614 = vadd.f32 %v613, 1.0
    %v615 = vrcp.pop %v614
    %v616 = vmul.f32 1.0, %v615
    %v617 = vtanh.pop %v610
    %v618 = vxor.u32 %v610, 2147483648
    %v619 = vmul.f32 %v618, 1.442695
    %v620 = vpow.pop %v619
    %v621 = vadd.f32 %v620, 1.0
    %v622 = vrcp.pop %v621
    %v623 = vmul.f32 1.0, %v622
    %v624 = vmul.f32 %v616, %v555
    %v625 = vmul.f32 %v616, %v617
    %627 = vrot.lane.b32.xlu0 %v625, 64
    %v628 = vpop.permute.xlu0 %627
    %v630 = vadd.f32 %v624, %v628
    %v631 = vtanh.pop %v630
    %v632 = vmul.f32 %v623, %v631
    %s633 = scalar_lea.vmem [#allocation2], 64
    %v634 = vld [vmem:[%s633] sm:$0xff]
    %v635 = vld [vmem:[%s633 + $0x8] sm:$0xff]
    %v636 = vpack.c.bf16 %v632, %v632
    %638 = vrot.lane.b32.xlu0 %v636, 64
    %v639 = vpop.permute.xlu0 %638
    %v641 = vsel %vm339, %v639, 0
    %643 = vmatprep.subr.bf16.mxu0 %v324
    %644 = vmatpush1.bf16.msra.mxu0 %v323
    %645 = vmatprep.subr.bf16.mxu0 %v326
    %646 = vmatpush1.bf16.msra.mxu0 %v325
    %647 = vmatprep.subr.bf16.mxu0 %v328
    %648 = vmatpush1.bf16.msra.mxu0 %v327
    %649 = vmatprep.subr.bf16.mxu0 %v330
    %650 = vmatpush1.bf16.msra.mxu0 %v329
    %651 = vmatprep.subr.bf16.mxu0 0
    %652 = vmatpush1.bf16.msra.mxu0 0
    %653 = vmatprep.subr.bf16.mxu0 0
    %654 = vmatpush1.bf16.msra.mxu0 0
    %655 = vmatprep.subr.bf16.mxu0 0
    %656 = vmatpush1.bf16.msra.mxu0 0
    %657 = vmatprep.subr.bf16.mxu0 0
    %658 = vmatpush1.bf16.msra.mxu0 0
    %659 = vmatprep.subr.bf16.mxu0 0
    %660 = vmatpush1.bf16.msra.mxu0 0
    %661 = vmatprep.subr.bf16.mxu0 0
    %662 = vmatpush1.bf16.msra.mxu0 0
    %663 = vmatprep.subr.bf16.mxu0 0
    %664 = vmatpush1.bf16.msra.mxu0 0
    %665 = vmatprep.subr.bf16.mxu0 0
    %666 = vmatpush1.bf16.msra.mxu0 0
    %667 = vmatprep.subr.bf16.mxu0 0
    %668 = vmatpush1.bf16.msra.mxu0 0
    %669 = vmatprep.subr.bf16.mxu0 0
    %670 = vmatpush1.bf16.msra.mxu0 0
    %671 = vmatprep.subr.bf16.mxu0 0
    %672 = vmatpush1.bf16.msra.mxu0 0
    %673 = vmatprep.subr.bf16.mxu0 0
    %674 = vmatpush1.bf16.msra.mxu0 0
    %675 = vmatprep.mubr.bf16.mxu0 0
    %676 = vmatmul.mubr.bf16.gmra.mrb[0].mxu0 %v641
    %v677 = vpop.f32.mrb[0].mxu0
    %v678 = vadd.f32 0.0, %v677
    %v679 = vpop.f32.mrb[0].mxu0
    %v680 = vadd.f32 0.0, %v679
    %v681 = vpop.f32.mrb[0].mxu0
    %v682 = vpop.f32.mrb[0].mxu0
    %683 = vdwg.mxu0
    %v684 = vadd.f32 %v634, %v678
    %v685 = vadd.f32 %v635, %v680
    %v686 = vxor.u32 %v684, 2147483648
    %v687 = vmul.f32 %v686, 1.442695
    %v688 = vpow.pop %v687
    %v689 = vadd.f32 %v688, 1.0
    %v690 = vrcp.pop %v689
    %v691 = vmul.f32 1.0, %v690
    %v692 = vtanh.pop %v685
    %v693 = vxor.u32 %v685, 2147483648
    %v694 = vmul.f32 %v693, 1.442695
    %v695 = vpow.pop %v694
    %v696 = vadd.f32 %v695, 1.0
    %v697 = vrcp.pop %v696
    %v698 = vmul.f32 1.0, %v697
    %v699 = vmul.f32 %v691, %v630
    %v700 = vmul.f32 %v691, %v692
    %702 = vrot.lane.b32.xlu0 %v700, 64
    %v703 = vpop.permute.xlu0 %702
    %v705 = vadd.f32 %v699, %v703
    %v706 = vtanh.pop %v705
    %v707 = vmul.f32 %v698, %v706
    %s708 = scalar_lea.vmem [#allocation2], 80
    %v709 = vld [vmem:[%s708] sm:$0xff]
    %v710 = vld [vmem:[%s708 + $0x8] sm:$0xff]
    %v711 = vpack.c.bf16 %v707, %v707
    %713 = vrot.lane.b32.xlu0 %v711, 64
    %v714 = vpop.permute.xlu0 %713
    %v716 = vsel %vm339, %v714, 0
    %718 = vmatprep.subr.bf16.mxu0 %v324
    %719 = vmatpush1.bf16.msra.mxu0 %v323
    %720 = vmatprep.subr.bf16.mxu0 %v326
    %721 = vmatpush1.bf16.msra.mxu0 %v325
    %722 = vmatprep.subr.bf16.mxu0 %v328
    %723 = vmatpush1.bf16.msra.mxu0 %v327
    %724 = vmatprep.subr.bf16.mxu0 %v330
    %725 = vmatpush1.bf16.msra.mxu0 %v329
    %726 = vmatprep.subr.bf16.mxu0 0
    %727 = vmatpush1.bf16.msra.mxu0 0
    %728 = vmatprep.subr.bf16.mxu0 0
    %729 = vmatpush1.bf16.msra.mxu0 0
    %730 = vmatprep.subr.bf16.mxu0 0
    %731 = vmatpush1.bf16.msra.mxu0 0
    %732 = vmatprep.subr.bf16.mxu0 0
    %733 = vmatpush1.bf16.msra.mxu0 0
    %734 = vmatprep.subr.bf16.mxu0 0
    %735 = vmatpush1.bf16.msra.mxu0 0
    %736 = vmatprep.subr.bf16.mxu0 0
    %737 = vmatpush1.bf16.msra.mxu0 0
    %738 = vmatprep.subr.bf16.mxu0 0
    %739 = vmatpush1.bf16.msra.mxu0 0
    %740 = vmatprep.subr.bf16.mxu0 0
    %741 = vmatpush1.bf16.msra.mxu0 0
    %742 = vmatprep.subr.bf16.mxu0 0
    %743 = vmatpush1.bf16.msra.mxu0 0
    %744 = vmatprep.subr.bf16.mxu0 0
    %745 = vmatpush1.bf16.msra.mxu0 0
    %746 = vmatprep.subr.bf16.mxu0 0
    %747 = vmatpush1.bf16.msra.mxu0 0
    %748 = vmatprep.subr.bf16.mxu0 0
    %749 = vmatpush1.bf16.msra.mxu0 0
    %750 = vmatprep.mubr.bf16.mxu0 0
    %751 = vmatmul.mubr.bf16.gmra.mrb[0].mxu0 %v716
    %v752 = vpop.f32.mrb[0].mxu0
    %v753 = vadd.f32 0.0, %v752
    %v754 = vpop.f32.mrb[0].mxu0
    %v755 = vadd.f32 0.0, %v754
    %v756 = vpop.f32.mrb[0].mxu0
    %v757 = vpop.f32.mrb[0].mxu0
    %758 = vdwg.mxu0
    %v759 = vadd.f32 %v709, %v753
    %v760 = vadd.f32 %v710, %v755
    %v761 = vxor.u32 %v759, 2147483648
    %v762 = vmul.f32 %v761, 1.442695
    %v763 = vpow.pop %v762
    %v764 = vadd.f32 %v763, 1.0
    %v765 = vrcp.pop %v764
    %v766 = vmul.f32 1.0, %v765
    %v767 = vtanh.pop %v760
    %v768 = vxor.u32 %v760, 2147483648
    %v769 = vmul.f32 %v768, 1.442695
    %v770 = vpow.pop %v769
    %v771 = vadd.f32 %v770, 1.0
    %v772 = vrcp.pop %v771
    %v773 = vmul.f32 1.0, %v772
    %v774 = vmul.f32 %v766, %v705
    %v775 = vmul.f32 %v766, %v767
    %777 = vrot.lane.b32.xlu0 %v775, 64
    %v778 = vpop.permute.xlu0 %777
    %v780 = vadd.f32 %v774, %v778
    %v781 = vtanh.pop %v780
    %v782 = vmul.f32 %v773, %v781
    %s783 = scalar_lea.vmem [#allocation2], 96
    %v784 = vld [vmem:[%s783] sm:$0xff]
    %v785 = vld [vmem:[%s783 + $0x8] sm:$0xff]
    %v786 = vpack.c.bf16 %v782, %v782
    %788 = vrot.lane.b32.xlu0 %v786, 64
    %v789 = vpop.permute.xlu0 %788
    %v791 = vsel %vm339, %v789, 0
    %793 = vmatprep.subr.bf16.mxu0 %v324
    %794 = vmatpush1.bf16.msra.mxu0 %v323
    %795 = vmatprep.subr.bf16.mxu0 %v326
    %796 = vmatpush1.bf16.msra.mxu0 %v325
    %797 = vmatprep.subr.bf16.mxu0 %v328
    %798 = vmatpush1.bf16.msra.mxu0 %v327
    %799 = vmatprep.subr.bf16.mxu0 %v330
    %800 = vmatpush1.bf16.msra.mxu0 %v329
    %801 = vmatprep.subr.bf16.mxu0 0
    %802 = vmatpush1.bf16.msra.mxu0 0
    %803 = vmatprep.subr.bf16.mxu0 0
    %804 = vmatpush1.bf16.msra.mxu0 0
    %805 = vmatprep.subr.bf16.mxu0 0
    %806 = vmatpush1.bf16.msra.mxu0 0
    %807 = vmatprep.subr.bf16.mxu0 0
    %808 = vmatpush1.bf16.msra.mxu0 0
    %809 = vmatprep.subr.bf16.mxu0 0
    %810 = vmatpush1.bf16.msra.mxu0 0
    %811 = vmatprep.subr.bf16.mxu0 0
    %812 = vmatpush1.bf16.msra.mxu0 0
    %813 = vmatprep.subr.bf16.mxu0 0
    %814 = vmatpush1.bf16.msra.mxu0 0
    %815 = vmatprep.subr.bf16.mxu0 0
    %816 = vmatpush1.bf16.msra.mxu0 0
    %817 = vmatprep.subr.bf16.mxu0 0
    %818 = vmatpush1.bf16.msra.mxu0 0
    %819 = vmatprep.subr.bf16.mxu0 0
    %820 = vmatpush1.bf16.msra.mxu0 0
    %821 = vmatprep.subr.bf16.mxu0 0
    %822 = vmatpush1.bf16.msra.mxu0 0
    %823 = vmatprep.subr.bf16.mxu0 0
    %824 = vmatpush1.bf16.msra.mxu0 0
    %825 = vmatprep.mubr.bf16.mxu0 0
    %826 = vmatmul.mubr.bf16.gmra.mrb[0].mxu0 %v791
    %v827 = vpop.f32.mrb[0].mxu0
    %v828 = vadd.f32 0.0, %v827
    %v829 = vpop.f32.mrb[0].mxu0
    %v830 = vadd.f32 0.0, %v829
    %v831 = vpop.f32.mrb[0].mxu0
    %v832 = vpop.f32.mrb[0].mxu0
    %833 = vdwg.mxu0
    %v834 = vadd.f32 %v784, %v828
    %v835 = vadd.f32 %v785, %v830
    %v836 = vxor.u32 %v834, 2147483648
    %v837 = vmul.f32 %v836, 1.442695
    %v838 = vpow.pop %v837
    %v839 = vadd.f32 %v838, 1.0
    %v840 = vrcp.pop %v839
    %v841 = vmul.f32 1.0, %v840
    %v842 = vtanh.pop %v835
    %v843 = vxor.u32 %v835, 2147483648
    %v844 = vmul.f32 %v843, 1.442695
    %v845 = vpow.pop %v844
    %v846 = vadd.f32 %v845, 1.0
    %v847 = vrcp.pop %v846
    %v848 = vmul.f32 1.0, %v847
    %v849 = vmul.f32 %v841, %v780
    %v850 = vmul.f32 %v841, %v842
    %852 = vrot.lane.b32.xlu0 %v850, 64
    %v853 = vpop.permute.xlu0 %852
    %v855 = vadd.f32 %v849, %v853
    %v856 = vtanh.pop %v855
    %v857 = vmul.f32 %v848, %v856
    %s858 = scalar_lea.vmem [#allocation2], 112
    %v859 = vld [vmem:[%s858] sm:$0xff]
    %v860 = vld [vmem:[%s858 + $0x8] sm:$0xff]
    %v861 = vpack.c.bf16 %v857, %v857
    %863 = vrot.lane.b32.xlu0 %v861, 64
    %v864 = vpop.permute.xlu0 %863
    %v866 = vsel %vm339, %v864, 0
    %868 = vmatprep.subr.bf16.mxu0 %v324
    %869 = vmatpush1.bf16.msra.mxu0 %v323
    %870 = vmatprep.subr.bf16.mxu0 %v326
    %871 = vmatpush1.bf16.msra.mxu0 %v325
    %872 = vmatprep.subr.bf16.mxu0 %v328
    %873 = vmatpush1.bf16.msra.mxu0 %v327
    %874 = vmatprep.subr.bf16.mxu0 %v330
    %875 = vmatpush1.bf16.msra.mxu0 %v329
    %876 = vmatprep.subr.bf16.mxu0 0
    %877 = vmatpush1.bf16.msra.mxu0 0
    %878 = vmatprep.subr.bf16.mxu0 0
    %879 = vmatpush1.bf16.msra.mxu0 0
    %880 = vmatprep.subr.bf16.mxu0 0
    %881 = vmatpush1.bf16.msra.mxu0 0
    %882 = vmatprep.subr.bf16.mxu0 0
    %883 = vmatpush1.bf16.msra.mxu0 0
    %884 = vmatprep.subr.bf16.mxu0 0
    %885 = vmatpush1.bf16.msra.mxu0 0
    %886 = vmatprep.subr.bf16.mxu0 0
    %887 = vmatpush1.bf16.msra.mxu0 0
    %888 = vmatprep.subr.bf16.mxu0 0
    %889 = vmatpush1.bf16.msra.mxu0 0
    %890 = vmatprep.subr.bf16.mxu0 0
    %891 = vmatpush1.bf16.msra.mxu0 0
    %892 = vmatprep.subr.bf16.mxu0 0
    %893 = vmatpush1.bf16.msra.mxu0 0
    %894 = vmatprep.subr.bf16.mxu0 0
    %895 = vmatpush1.bf16.msra.mxu0 0
    %896 = vmatprep.subr.bf16.mxu0 0
    %897 = vmatpush1.bf16.msra.mxu0 0
    %898 = vmatprep.subr.bf16.mxu0 0
    %899 = vmatpush1.bf16.msra.mxu0 0
    %900 = vmatprep.mubr.bf16.mxu0 0
    %901 = vmatmul.mubr.bf16.gmra.mrb[0].mxu0 %v866
    %v902 = vpop.f32.mrb[0].mxu0
    %v903 = vadd.f32 0.0, %v902
    %v904 = vpop.f32.mrb[0].mxu0
    %v905 = vadd.f32 0.0, %v904
    %v906 = vpop.f32.mrb[0].mxu0
    %v907 = vpop.f32.mrb[0].mxu0
    %908 = vdwg.mxu0
    %v909 = vadd.f32 %v859, %v903
    %v910 = vadd.f32 %v860, %v905
    %v911 = vxor.u32 %v909, 2147483648
    %v912 = vmul.f32 %v911, 1.442695
    %v913 = vpow.pop %v912
    %v914 = vadd.f32 %v913, 1.0
    %v915 = vrcp.pop %v914
    %v916 = vmul.f32 1.0, %v915
    %v917 = vtanh.pop %v910
    %v918 = vxor.u32 %v910, 2147483648
    %v919 = vmul.f32 %v918, 1.442695
    %v920 = vpow.pop %v919
    %v921 = vadd.f32 %v920, 1.0
    %v922 = vrcp.pop %v921
    %v923 = vmul.f32 1.0, %v922
    %v924 = vmul.f32 %v916, %v855
    %v925 = vmul.f32 %v916, %v917
    %927 = vrot.lane.b32.xlu0 %v925, 64
    %v928 = vpop.permute.xlu0 %927
    %v930 = vadd.f32 %v924, %v928
    %v931 = vtanh.pop %v930
    %v932 = vmul.f32 %v923, %v931
    %v933 = vld [vmem:[%s1] sm:$0xff]
    %v934 = vld [vmem:[%s1 + $0x8] sm:$0xff]
    %v935 = vld [vmem:[%s1 + $0x10] sm:$0xff]
    %v936 = vld [vmem:[%s1 + $0x18] sm:$0xff]
    %v937 = vld [vmem:[%s1 + $0x20] sm:$0xff]
    %v938 = vld [vmem:[%s1 + $0x28] sm:$0xff]
    %v939 = vld [vmem:[%s1 + $0x30] sm:$0xff]
    %940 = vset.pattern.permute.xlu0 0
    %941 = vperm.xlu0 %940, %v933
    %v942 = vpop.permute.xlu0 %941
    %943 = vset.pattern.permute.xlu0 0
    %944 = vperm.xlu0 %943, %v934
    %v945 = vpop.permute.xlu0 %944
    %946 = vset.pattern.permute.xlu0 0
    %947 = vperm.xlu0 %946, %v935
    %v948 = vpop.permute.xlu0 %947
    %949 = vset.pattern.permute.xlu0 0
    %950 = vperm.xlu0 %949, %v936
    %v951 = vpop.permute.xlu0 %950
    %952 = vset.pattern.permute.xlu0 0
    %953 = vperm.xlu0 %952, %v937
    %v954 = vpop.permute.xlu0 %953
    %955 = vset.pattern.permute.xlu0 0
    %956 = vperm.xlu0 %955, %v938
    %v957 = vpop.permute.xlu0 %956
    %958 = vset.pattern.permute.xlu0 0
    %959 = vperm.xlu0 %958, %v939
    %v960 = vpop.permute.xlu0 %959
    %vm961 = vcmp.eq.s32.totalorder %v942, %v59
    %vm962 = vcmp.eq.s32.totalorder %v945, %v59
    %vm963 = vcmp.eq.s32.totalorder %v948, %v59
    %vm964 = vcmp.eq.s32.totalorder %v951, %v59
    %vm965 = vcmp.eq.s32.totalorder %v954, %v59
    %vm966 = vcmp.eq.s32.totalorder %v957, %v59
    %vm967 = vcmp.eq.s32.totalorder %v960, %v59
    %v968 = vsel %vm961, 1.0, 0.0
    %v969 = vsel %vm962, 1.0, 0.0
    %v970 = vsel %vm963, 1.0, 0.0
    %v971 = vsel %vm964, 1.0, 0.0
    %v972 = vsel %vm965, 1.0, 0.0
    %v973 = vsel %vm966, 1.0, 0.0
    %v974 = vsel %vm967, 1.0, 0.0
    %v975 = vpack.c.bf16 %v969, %v968
    %v976 = vpack.c.bf16 %v971, %v970
    %v977 = vpack.c.bf16 %v973, %v972
    %v978 = vpack.c.bf16 %v974, %v974
    %v979 = vld [vmem:[#allocation3] sm:$0xff]
    %v980 = vld [vmem:[#allocation3 + $0x8] sm:$0xf]
    %v981 = vld [vmem:[#allocation3 + $0xc] sm:$0xff]
    %v982 = vld [vmem:[#allocation3 + $0x14] sm:$0xf]
    %v983 = vld [vmem:[#allocation3 + $0x18] sm:$0xff]
    %v984 = vld [vmem:[#allocation3 + $0x20] sm:$0xf]
    %v985 = vld [vmem:[#allocation3 + $0x24] sm:$0xff]
    %v986 = vld [vmem:[#allocation3 + $0x2c] sm:$0xf]
    %v987 = vld [vmem:[#allocation3 + $0x30] sm:$0xff]
    %v988 = vld [vmem:[#allocation3 + $0x38] sm:$0xf]
    %v989 = vld [vmem:[#allocation3 + $0x3c] sm:$0xff]
    %v990 = vld [vmem:[#allocation3 + $0x44] sm:$0xf]
    %v991 = vld [vmem:[#allocation3 + $0x48] sm:$0xff]
    %v992 = vld [vmem:[#allocation3 + $0x50] sm:$0xf]
    %v993 = vld [vmem:[#allocation3 + $0x54] sm:$0xff]
    %v994 = vld [vmem:[#allocation3 + $0x5c] sm:$0xf]
    %v995 = vld [vmem:[#allocation3 + $0x60] sm:$0xff]
    %v996 = vld [vmem:[#allocation3 + $0x68] sm:$0xf]
    %v997 = vld [vmem:[#allocation3 + $0x6c] sm:$0xff]
    %v998 = vld [vmem:[#allocation3 + $0x74] sm:$0xf]
    %v999 = vld [vmem:[#allocation3 + $0x78] sm:$0xff]
    %v1000 = vld [vmem:[#allocation3 + $0x80] sm:$0xf]
    %v1001 = vld [vmem:[#allocation3 + $0x84] sm:$0xff]
    %v1002 = vld [vmem:[#allocation3 + $0x8c] sm:$0xf]
    %v1003 = vld [vmem:[#allocation3 + $0x90] sm:$0xff]
    %v1004 = vld [vmem:[#allocation3 + $0x98] sm:$0xf]
    %v1005 = vld [vmem:[#allocation3 + $0x9c] sm:$0xff]
    %v1006 = vld [vmem:[#allocation3 + $0xa4] sm:$0xf]
    %v1007 = vld [vmem:[#allocation3 + $0xa8] sm:$0xff]
    %v1008 = vld [vmem:[#allocation3 + $0xb0] sm:$0xf]
    %v1009 = vld [vmem:[#allocation3 + $0xb4] sm:$0xff]
    %v1010 = vld [vmem:[#allocation3 + $0xbc] sm:$0xf]
    %v1043 = vunpack.c.l.b16 %v979
    %v1044 = vunpack.c.h.b16 %v979
    %v1045 = vunpack.c.l.b16 %v980
    %v1046 = vunpack.c.l.b16 %v981
    %v1047 = vunpack.c.h.b16 %v981
    %v1048 = vunpack.c.l.b16 %v982
    %v1049 = vunpack.c.l.b16 %v983
    %v1050 = vunpack.c.h.b16 %v983
    %v1051 = vunpack.c.l.b16 %v984
    %v1052 = vunpack.c.l.b16 %v985
    %v1053 = vunpack.c.h.b16 %v985
    %v1054 = vunpack.c.l.b16 %v986
    %v1055 = vunpack.c.l.b16 %v987
    %v1056 = vunpack.c.h.b16 %v987
    %v1057 = vunpack.c.l.b16 %v988
    %v1058 = vunpack.c.l.b16 %v989
    %v1059 = vunpack.c.h.b16 %v989
    %v1060 = vunpack.c.l.b16 %v990
    %v1061 = vunpack.c.l.b16 %v991
    %v1062 = vunpack.c.h.b16 %v991
    %v1063 = vunpack.c.l.b16 %v992
    %v1064 = vunpack.c.l.b16 %v993
    %v1065 = vunpack.c.h.b16 %v993
    %v1066 = vunpack.c.l.b16 %v994
    %v1067 = vunpack.c.l.b16 %v995
    %v1068 = vunpack.c.h.b16 %v995
    %v1069 = vunpack.c.l.b16 %v996
    %v1070 = vunpack.c.l.b16 %v997
    %v1071 = vunpack.c.h.b16 %v997
    %v1072 = vunpack.c.l.b16 %v998
    %v1073 = vunpack.c.l.b16 %v999
    %v1074 = vunpack.c.h.b16 %v999
    %v1075 = vunpack.c.l.b16 %v1000
    %v1076 = vunpack.c.l.b16 %v1001
    %v1077 = vunpack.c.h.b16 %v1001
    %v1078 = vunpack.c.l.b16 %v1002
    %v1079 = vunpack.c.l.b16 %v1003
    %v1080 = vunpack.c.h.b16 %v1003
    %v1081 = vunpack.c.l.b16 %v1004
    %v1082 = vunpack.c.l.b16 %v1005
    %v1083 = vunpack.c.h.b16 %v1005
    %v1084 = vunpack.c.l.b16 %v1006
    %v1085 = vunpack.c.l.b16 %v1007
    %v1086 = vunpack.c.h.b16 %v1007
    %v1087 = vunpack.c.l.b16 %v1008
    %v1088 = vunpack.c.l.b16 %v1009
    %v1089 = vunpack.c.h.b16 %v1009
    %v1090 = vunpack.c.l.b16 %v1010
    %v1091 = vpack.c.b16 %v1046, %v1043
    %v1092 = vpack.c.b16 %v1047, %v1044
    %v1093 = vpack.c.b16 %v1048, %v1045
    %v1094 = vpack.c.b16 %v1052, %v1049
    %v1095 = vpack.c.b16 %v1053, %v1050
    %v1096 = vpack.c.b16 %v1054, %v1051
    %v1097 = vpack.c.b16 %v1058, %v1055
    %v1098 = vpack.c.b16 %v1059, %v1056
    %v1099 = vpack.c.b16 %v1060, %v1057
    %v1100 = vpack.c.b16 %v1064, %v1061
    %v1101 = vpack.c.b16 %v1065, %v1062
    %v1102 = vpack.c.b16 %v1066, %v1063
    %v1103 = vpack.c.b16 %v1070, %v1067
    %v1104 = vpack.c.b16 %v1071, %v1068
    %v1105 = vpack.c.b16 %v1072, %v1069
    %v1106 = vpack.c.b16 %v1076, %v1073
    %v1107 = vpack.c.b16 %v1077, %v1074
    %v1108 = vpack.c.b16 %v1078, %v1075
    %v1109 = vpack.c.b16 %v1082, %v1079
    %v1110 = vpack.c.b16 %v1083, %v1080
    %v1111 = vpack.c.b16 %v1084, %v1081
    %v1112 = vpack.c.b16 %v1088, %v1085
    %v1113 = vpack.c.b16 %v1089, %v1086
    %v1114 = vpack.c.b16 %v1090, %v1087
    %1139 = vmatprep.subr.bf16.mxu0 %v1092
    %1140 = vmatpush1.bf16.msra.mxu0 %v1091
    %1141 = vmatprep.subr.bf16.mxu0 %v1095
    %1142 = vmatpush1.bf16.msra.mxu0 %v1094
    %1143 = vmatprep.subr.bf16.mxu0 %v1098
    %1144 = vmatpush1.bf16.msra.mxu0 %v1097
    %1145 = vmatprep.subr.bf16.mxu0 %v1101
    %1146 = vmatpush1.bf16.msra.mxu0 %v1100
    %1147 = vmatprep.subr.bf16.mxu0 %v1104
    %1148 = vmatpush1.bf16.msra.mxu0 %v1103
    %1149 = vmatprep.subr.bf16.mxu0 %v1107
    %1150 = vmatpush1.bf16.msra.mxu0 %v1106
    %1151 = vmatprep.subr.bf16.mxu0 %v1110
    %1152 = vmatpush1.bf16.msra.mxu0 %v1109
    %1153 = vmatprep.subr.bf16.mxu0 %v1113
    %1154 = vmatpush1.bf16.msra.mxu0 %v1112
    %1155 = vmatprep.subr.bf16.mxu0 0
    %1156 = vmatpush1.bf16.msra.mxu0 0
    %1157 = vmatprep.subr.bf16.mxu0 0
    %1158 = vmatpush1.bf16.msra.mxu0 0
    %1159 = vmatprep.subr.bf16.mxu0 0
    %1160 = vmatpush1.bf16.msra.mxu0 0
    %1161 = vmatprep.subr.bf16.mxu0 0
    %1162 = vmatpush1.bf16.msra.mxu0 0
    %1163 = vmatprep.subr.bf16.mxu0 0
    %1164 = vmatpush1.bf16.msra.mxu0 0
    %1165 = vmatprep.subr.bf16.mxu0 0
    %1166 = vmatpush1.bf16.msra.mxu0 0
    %1167 = vmatprep.subr.bf16.mxu0 0
    %1168 = vmatpush1.bf16.msra.mxu0 0
    %1169 = vmatprep.subr.bf16.mxu0 0
    %1170 = vmatpush1.bf16.msra.mxu0 0
    %1171 = vmatprep.mubr.bf16.mxu0 0
    %1172 = vmatmul.mubr.bf16.gmra.mrb[0].mxu0 %v975
    %v1173 = vpop.f32.mrb[0].mxu0
    %v1174 = vadd.f32 0.0, %v1173
    %v1175 = vpop.f32.mrb[0].mxu0
    %v1176 = vadd.f32 0.0, %v1175
    %v1177 = vpop.f32.mrb[0].mxu0
    %v1178 = vadd.f32 0.0, %v1177
    %v1179 = vpop.f32.mrb[0].mxu0
    %v1180 = vadd.f32 0.0, %v1179
    %1181 = vmatprep.mubr.bf16.mxu0 0
    %1182 = vmatmul.mubr.bf16.gmra.mrb[0].mxu0 %v976
    %v1183 = vpop.f32.mrb[0].mxu0
    %v1184 = vadd.f32 0.0, %v1183
    %v1185 = vpop.f32.mrb[0].mxu0
    %v1186 = vadd.f32 0.0, %v1185
    %v1187 = vpop.f32.mrb[0].mxu0
    %v1188 = vadd.f32 0.0, %v1187
    %v1189 = vpop.f32.mrb[0].mxu0
    %v1190 = vadd.f32 0.0, %v1189
    %1191 = vmatprep.mubr.bf16.mxu0 0
    %1192 = vmatmul.mubr.bf16.gmra.mrb[0].mxu0 %v977
    %v1193 = vpop.f32.mrb[0].mxu0
    %v1194 = vadd.f32 0.0, %v1193
    %v1195 = vpop.f32.mrb[0].mxu0
    %v1196 = vadd.f32 0.0, %v1195
    %v1197 = vpop.f32.mrb[0].mxu0
    %v1198 = vadd.f32 0.0, %v1197
    %v1199 = vpop.f32.mrb[0].mxu0
    %v1200 = vadd.f32 0.0, %v1199
    %1201 = vmatprep.mubr.bf16.mxu0 0
    %1202 = vmatmul.mubr.bf16.gmra.mrb[0].mxu0 %v978
    %v1203 = vpop.f32.mrb[0].mxu0
    %v1204 = vadd.f32 0.0, %v1203
    %v1205 = vpop.f32.mrb[0].mxu0
    %v1206 = vadd.f32 0.0, %v1205
    %v1207 = vpop.f32.mrb[0].mxu0
    %v1208 = vpop.f32.mrb[0].mxu0
    %1209 = vdwg.mxu0
    %1210 = vmatprep.subr.bf16.mxu0 0
    %1211 = vmatpush1.bf16.msra.mxu0 %v1093
    %1212 = vmatprep.subr.bf16.mxu0 0
    %1213 = vmatpush1.bf16.msra.mxu0 %v1096
    %1214 = vmatprep.subr.bf16.mxu0 0
    %1215 = vmatpush1.bf16.msra.mxu0 %v1099
    %1216 = vmatprep.subr.bf16.mxu0 0
    %1217 = vmatpush1.bf16.msra.mxu0 %v1102
    %1218 = vmatprep.subr.bf16.mxu0 0
    %1219 = vmatpush1.bf16.msra.mxu0 %v1105
    %1220 = vmatprep.subr.bf16.mxu0 0
    %1221 = vmatpush1.bf16.msra.mxu0 %v1108
    %1222 = vmatprep.subr.bf16.mxu0 0
    %1223 = vmatpush1.bf16.msra.mxu0 %v1111
    %1224 = vmatprep.subr.bf16.mxu0 0
    %1225 = vmatpush1.bf16.msra.mxu0 %v1114
    %1226 = vmatprep.subr.bf16.mxu0 0
    %1227 = vmatpush1.bf16.msra.mxu0 0
    %1228 = vmatprep.subr.bf16.mxu0 0
    %1229 = vmatpush1.bf16.msra.mxu0 0
    %1230 = vmatprep.subr.bf16.mxu0 0
    %1231 = vmatpush1.bf16.msra.mxu0 0
    %1232 = vmatprep.subr.bf16.mxu0 0
    %1233 = vmatpush1.bf16.msra.mxu0 0
    %1234 = vmatprep.subr.bf16.mxu0 0
    %1235 = vmatpush1.bf16.msra.mxu0 0
    %1236 = vmatprep.subr.bf16.mxu0 0
    %1237 = vmatpush1.bf16.msra.mxu0 0
    %1238 = vmatprep.subr.bf16.mxu0 0
    %1239 = vmatpush1.bf16.msra.mxu0 0
    %1240 = vmatprep.subr.bf16.mxu0 0
    %1241 = vmatpush1.bf16.msra.mxu0 0
    %1242 = vmatprep.mubr.bf16.mxu0 0
    %1243 = vmatmul.mubr.bf16.gmra.mrb[0].mxu0 %v975
    %v1244 = vpop.f32.mrb[0].mxu0
    %v1245 = vadd.f32 0.0, %v1244
    %v1246 = vpop.f32.mrb[0].mxu0
    %v1247 = vpop.f32.mrb[0].mxu0
    %v1248 = vadd.f32 0.0, %v1247
    %v1249 = vpop.f32.mrb[0].mxu0
    %1250 = vmatprep.mubr.bf16.mxu0 0
    %1251 = vmatmul.mubr.bf16.gmra.mrb[0].mxu0 %v976
    %v1252 = vpop.f32.mrb[0].mxu0
    %v1253 = vadd.f32 0.0, %v1252
    %v1254 = vpop.f32.mrb[0].mxu0
    %v1255 = vpop.f32.mrb[0].mxu0
    %v1256 = vadd.f32 0.0, %v1255
    %v1257 = vpop.f32.mrb[0].mxu0
    %1258 = vmatprep.mubr.bf16.mxu0 0
    %1259 = vmatmul.mubr.bf16.gmra.mrb[0].mxu0 %v977
    %v1260 = vpop.f32.mrb[0].mxu0
    %v1261 = vadd.f32 0.0, %v1260
    %v1262 = vpop.f32.mrb[0].mxu0
    %v1263 = vpop.f32.mrb[0].mxu0
    %v1264 = vadd.f32 0.0, %v1263
    %v1265 = vpop.f32.mrb[0].mxu0
    %1266 = vmatprep.mubr.bf16.mxu0 0
    %1267 = vmatmul.mubr.bf16.gmra.mrb[0].mxu0 %v978
    %v1268 = vpop.f32.mrb[0].mxu0
    %v1269 = vadd.f32 0.0, %v1268
    %v1270 = vpop.f32.mrb[0].mxu0
    %v1271 = vpop.f32.mrb[0].mxu0
    %v1272 = vpop.f32.mrb[0].mxu0
    %1273 = vdwg.mxu0
    %v1274 = vpack.c.bf16 %v932, %v932
    %v1275 = vld [vmem:[#allocation6 + $0x8] sm:$0xff]
    %v1276 = vld [vmem:[#allocation6 + $0x10] sm:$0xf]
    %v1277 = vld [vmem:[#allocation6 + $0x24] sm:$0xff]
    %v1278 = vld [vmem:[#allocation6 + $0x2c] sm:$0xf]
    %v1279 = vld [vmem:[#allocation6 + $0x40] sm:$0xff]
    %v1280 = vld [vmem:[#allocation6 + $0x48] sm:$0xf]
    %v1281 = vld [vmem:[#allocation6 + $0x5c] sm:$0xff]
    %v1282 = vld [vmem:[#allocation6 + $0x64] sm:$0xf]
    %v1283 = vld [vmem:[#allocation6 + $0x78] sm:$0xff]
    %v1284 = vld [vmem:[#allocation6 + $0x80] sm:$0xf]
    %v1285 = vld [vmem:[#allocation6 + $0x94] sm:$0xff]
    %v1286 = vld [vmem:[#allocation6 + $0x9c] sm:$0xf]
    %v1287 = vld [vmem:[#allocation6 + $0xb0] sm:$0xff]
    %v1288 = vld [vmem:[#allocation6 + $0xb8] sm:$0xf]
    %v1289 = vld [vmem:[#allocation6 + $0xcc] sm:$0xff]
    %v1290 = vld [vmem:[#allocation6 + $0xd4] sm:$0xf]
    %1292 = vrot.lane.b32.xlu0 %v1274, 64
    %v1293 = vpop.permute.xlu0 %1292
    %v1310 = vunpack.c.l.b16 %v1275
    %v1311 = vunpack.c.h.b16 %v1275
    %v1312 = vunpack.c.l.b16 %v1276
    %v1313 = vunpack.c.l.b16 %v1277
    %v1314 = vunpack.c.h.b16 %v1277
    %v1315 = vunpack.c.l.b16 %v1278
    %v1316 = vunpack.c.l.b16 %v1279
    %v1317 = vunpack.c.h.b16 %v1279
    %v1318 = vunpack.c.l.b16 %v1280
    %v1319 = vunpack.c.l.b16 %v1281
    %v1320 = vunpack.c.h.b16 %v1281
    %v1321 = vunpack.c.l.b16 %v1282
    %v1322 = vunpack.c.l.b16 %v1283
    %v1323 = vunpack.c.h.b16 %v1283
    %v1324 = vunpack.c.l.b16 %v1284
    %v1325 = vunpack.c.l.b16 %v1285
    %v1326 = vunpack.c.h.b16 %v1285
    %v1327 = vunpack.c.l.b16 %v1286
    %v1328 = vunpack.c.l.b16 %v1287
    %v1329 = vunpack.c.h.b16 %v1287
    %v1330 = vunpack.c.l.b16 %v1288
    %v1331 = vunpack.c.l.b16 %v1289
    %v1332 = vunpack.c.h.b16 %v1289
    %v1333 = vunpack.c.l.b16 %v1290
    %v1334 = vpack.c.b16 %v1313, %v1310
    %v1335 = vpack.c.b16 %v1314, %v1311
    %v1336 = vpack.c.b16 %v1315, %v1312
    %v1337 = vpack.c.b16 %v1319, %v1316
    %v1338 = vpack.c.b16 %v1320, %v1317
    %v1339 = vpack.c.b16 %v1321, %v1318
    %v1340 = vpack.c.b16 %v1325, %v1322
    %v1341 = vpack.c.b16 %v1326, %v1323
    %v1342 = vpack.c.b16 %v1327, %v1324
    %v1343 = vpack.c.b16 %v1331, %v1328
    %v1344 = vpack.c.b16 %v1332, %v1329
    %v1345 = vpack.c.b16 %v1333, %v1330
    %v1359 = vsel %vm339, %v1293, 0
    %1361 = vmatprep.subr.bf16.mxu0 %v1335
    %1362 = vmatpush1.bf16.msra.mxu0 %v1334
    %1363 = vmatprep.subr.bf16.mxu0 %v1338
    %1364 = vmatpush1.bf16.msra.mxu0 %v1337
    %1365 = vmatprep.subr.bf16.mxu0 %v1341
    %1366 = vmatpush1.bf16.msra.mxu0 %v1340
    %1367 = vmatprep.subr.bf16.mxu0 %v1344
    %1368 = vmatpush1.bf16.msra.mxu0 %v1343
    %1369 = vmatprep.subr.bf16.mxu0 0
    %1370 = vmatpush1.bf16.msra.mxu0 0
    %1371 = vmatprep.subr.bf16.mxu0 0
    %1372 = vmatpush1.bf16.msra.mxu0 0
    %1373 = vmatprep.subr.bf16.mxu0 0
    %1374 = vmatpush1.bf16.msra.mxu0 0
    %1375 = vmatprep.subr.bf16.mxu0 0
    %1376 = vmatpush1.bf16.msra.mxu0 0
    %1377 = vmatprep.subr.bf16.mxu0 0
    %1378 = vmatpush1.bf16.msra.mxu0 0
    %1379 = vmatprep.subr.bf16.mxu0 0
    %1380 = vmatpush1.bf16.msra.mxu0 0
    %1381 = vmatprep.subr.bf16.mxu0 0
    %1382 = vmatpush1.bf16.msra.mxu0 0
    %1383 = vmatprep.subr.bf16.mxu0 0
    %1384 = vmatpush1.bf16.msra.mxu0 0
    %1385 = vmatprep.subr.bf16.mxu0 0
    %1386 = vmatpush1.bf16.msra.mxu0 0
    %1387 = vmatprep.subr.bf16.mxu0 0
    %1388 = vmatpush1.bf16.msra.mxu0 0
    %1389 = vmatprep.subr.bf16.mxu0 0
    %1390 = vmatpush1.bf16.msra.mxu0 0
    %1391 = vmatprep.subr.bf16.mxu0 0
    %1392 = vmatpush1.bf16.msra.mxu0 0
    %1393 = vmatprep.mubr.bf16.mxu0 0
    %1394 = vmatmul.mubr.bf16.gmra.mrb[0].mxu0 %v1359
    %v1395 = vpop.f32.mrb[0].mxu0
    %v1396 = vadd.f32 0.0, %v1395
    %v1397 = vpop.f32.mrb[0].mxu0
    %v1398 = vadd.f32 0.0, %v1397
    %v1399 = vpop.f32.mrb[0].mxu0
    %v1400 = vpop.f32.mrb[0].mxu0
    %1401 = vdwg.mxu0
    %1402 = vmatprep.subr.bf16.mxu0 0
    %1403 = vmatpush1.bf16.msra.mxu0 %v1336
    %1404 = vmatprep.subr.bf16.mxu0 0
    %1405 = vmatpush1.bf16.msra.mxu0 %v1339
    %1406 = vmatprep.subr.bf16.mxu0 0
    %1407 = vmatpush1.bf16.msra.mxu0 %v1342
    %1408 = vmatprep.subr.bf16.mxu0 0
    %1409 = vmatpush1.bf16.msra.mxu0 %v1345
    %1410 = vmatprep.subr.bf16.mxu0 0
    %1411 = vmatpush1.bf16.msra.mxu0 0
    %1412 = vmatprep.subr.bf16.mxu0 0
    %1413 = vmatpush1.bf16.msra.mxu0 0
    %1414 = vmatprep.subr.bf16.mxu0 0
    %1415 = vmatpush1.bf16.msra.mxu0 0
    %1416 = vmatprep.subr.bf16.mxu0 0
    %1417 = vmatpush1.bf16.msra.mxu0 0
    %1418 = vmatprep.subr.bf16.mxu0 0
    %1419 = vmatpush1.bf16.msra.mxu0 0
    %1420 = vmatprep.subr.bf16.mxu0 0
    %1421 = vmatpush1.bf16.msra.mxu0 0
    %1422 = vmatprep.subr.bf16.mxu0 0
    %1423 = vmatpush1.bf16.msra.mxu0 0
    %1424 = vmatprep.subr.bf16.mxu0 0
    %1425 = vmatpush1.bf16.msra.mxu0 0
    %1426 = vmatprep.subr.bf16.mxu0 0
    %1427 = vmatpush1.bf16.msra.mxu0 0
    %1428 = vmatprep.subr.bf16.mxu0 0
    %1429 = vmatpush1.bf16.msra.mxu0 0
    %1430 = vmatprep.subr.bf16.mxu0 0
    %1431 = vmatpush1.bf16.msra.mxu0 0
    %1432 = vmatprep.subr.bf16.mxu0 0
    %1433 = vmatpush1.bf16.msra.mxu0 0
    %1434 = vmatprep.mubr.bf16.mxu0 0
    %1435 = vmatmul.mubr.bf16.gmra.mrb[0].mxu0 %v1359
    %v1436 = vpop.f32.mrb[0].mxu0
    %v1437 = vadd.f32 0.0, %v1436
    %v1438 = vpop.f32.mrb[0].mxu0
    %v1439 = vpop.f32.mrb[0].mxu0
    %v1440 = vpop.f32.mrb[0].mxu0
    %1441 = vdwg.mxu0
    %v1442 = vpack.c.bf16 %v930, %v930
    %v1443 = vld [vmem:[#allocation6 + $0x14] sm:$0xf]
    %v1444 = vld [vmem:[#allocation6 + $0x30] sm:$0xf]
    %v1445 = vld [vmem:[#allocation6 + $0x4c] sm:$0xf]
    %v1446 = vld [vmem:[#allocation6 + $0x68] sm:$0xf]
    %v1447 = vld [vmem:[#allocation6 + $0x84] sm:$0xf]
    %v1448 = vld [vmem:[#allocation6 + $0xa0] sm:$0xf]
    %v1449 = vld [vmem:[#allocation6 + $0xbc] sm:$0xf]
    %v1450 = vld [vmem:[#allocation6 + $0xd8] sm:$0xf]
    %1452 = vrot.lane.b32.xlu0 %v1442, 64
    %v1453 = vpop.permute.xlu0 %1452
    %v1462 = vunpack.c.l.b16 %v1443
    %v1463 = vunpack.c.l.b16 %v1444
    %v1464 = vunpack.c.l.b16 %v1445
    %v1465 = vunpack.c.l.b16 %v1446
    %v1466 = vunpack.c.l.b16 %v1447
    %v1467 = vunpack.c.l.b16 %v1448
    %v1468 = vunpack.c.l.b16 %v1449
    %v1469 = vunpack.c.l.b16 %v1450
    %v1470 = vpack.c.b16 %v1463, %v1462
    %v1471 = vpack.c.b16 %v1465, %v1464
    %v1472 = vpack.c.b16 %v1467, %v1466
    %v1473 = vpack.c.b16 %v1469, %v1468
    %v1479 = vsel %vm339, %v1453, 0
    %1481 = vmatprep.subr.bf16.mxu0 0
    %1482 = vmatpush1.bf16.msra.mxu0 %v1470
    %1483 = vmatprep.subr.bf16.mxu0 0
    %1484 = vmatpush1.bf16.msra.mxu0 %v1471
    %1485 = vmatprep.subr.bf16.mxu0 0
    %1486 = vmatpush1.bf16.msra.mxu0 %v1472
    %1487 = vmatprep.subr.bf16.mxu0 0
    %1488 = vmatpush1.bf16.msra.mxu0 %v1473
    %1489 = vmatprep.subr.bf16.mxu0 0
    %1490 = vmatpush1.bf16.msra.mxu0 0
    %1491 = vmatprep.subr.bf16.mxu0 0
    %1492 = vmatpush1.bf16.msra.mxu0 0
    %1493 = vmatprep.subr.bf16.mxu0 0
    %1494 = vmatpush1.bf16.msra.mxu0 0
    %1495 = vmatprep.subr.bf16.mxu0 0
    %1496 = vmatpush1.bf16.msra.mxu0 0
    %1497 = vmatprep.subr.bf16.mxu0 0
    %1498 = vmatpush1.bf16.msra.mxu0 0
    %1499 = vmatprep.subr.bf16.mxu0 0
    %1500 = vmatpush1.bf16.msra.mxu0 0
    %1501 = vmatprep.subr.bf16.mxu0 0
    %1502 = vmatpush1.bf16.msra.mxu0 0
    %1503 = vmatprep.subr.bf16.mxu0 0
    %1504 = vmatpush1.bf16.msra.mxu0 0
    %1505 = vmatprep.subr.bf16.mxu0 0
    %1506 = vmatpush1.bf16.msra.mxu0 0
    %1507 = vmatprep.subr.bf16.mxu0 0
    %1508 = vmatpush1.bf16.msra.mxu0 0
    %1509 = vmatprep.subr.bf16.mxu0 0
    %1510 = vmatpush1.bf16.msra.mxu0 0
    %1511 = vmatprep.subr.bf16.mxu0 0
    %1512 = vmatpush1.bf16.msra.mxu0 0
    %1513 = vmatprep.mubr.bf16.mxu0 0
    %1514 = vmatmul.mubr.bf16.gmra.mrb[0].mxu0 %v1479
    %v1515 = vpop.f32.mrb[0].mxu0
    %v1516 = vadd.f32 0.0, %v1515
    %v1517 = vpop.f32.mrb[0].mxu0
    %v1518 = vpop.f32.mrb[0].mxu0
    %v1519 = vpop.f32.mrb[0].mxu0
    %1520 = vdwg.mxu0
    %v1521 = vadd.f32 %v1437, %v1516
    %v1522 = vadd.f32 %v1174, %v1396
    %v1523 = vadd.f32 %v1176, %v1398
    %v1524 = vadd.f32 %v1178, %v1396
    %v1525 = vadd.f32 %v1180, %v1398
    %v1526 = vadd.f32 %v1184, %v1396
    %v1527 = vadd.f32 %v1186, %v1398
    %v1528 = vadd.f32 %v1188, %v1396
    %v1529 = vadd.f32 %v1190, %v1398
    %v1530 = vadd.f32 %v1194, %v1396
    %v1531 = vadd.f32 %v1196, %v1398
    %v1532 = vadd.f32 %v1198, %v1396
    %v1533 = vadd.f32 %v1200, %v1398
    %v1534 = vadd.f32 %v1204, %v1396
    %v1535 = vadd.f32 %v1206, %v1398
    %v1536 = vxor.u32 %v1522, 2147483648
    %v1537 = vxor.u32 %v1524, 2147483648
    %v1538 = vxor.u32 %v1526, 2147483648
    %v1539 = vxor.u32 %v1528, 2147483648
    %v1540 = vxor.u32 %v1530, 2147483648
    %v1541 = vxor.u32 %v1532, 2147483648
    %v1542 = vxor.u32 %v1534, 2147483648
    %v1543 = vmul.f32 %v1536, 1.442695
    %v1544 = vpow.pop %v1543
    %v1545 = vmul.f32 %v1537, 1.442695
    %v1546 = vpow.pop %v1545
    %v1547 = vmul.f32 %v1538, 1.442695
    %v1548 = vpow.pop %v1547
    %v1549 = vmul.f32 %v1539, 1.442695
    %v1550 = vpow.pop %v1549
    %v1551 = vmul.f32 %v1540, 1.442695
    %v1552 = vpow.pop %v1551
    %v1553 = vmul.f32 %v1541, 1.442695
    %v1554 = vpow.pop %v1553
    %v1555 = vmul.f32 %v1542, 1.442695
    %v1556 = vpow.pop %v1555
    %v1557 = vadd.f32 %v1544, 1.0
    %v1558 = vadd.f32 %v1546, 1.0
    %v1559 = vadd.f32 %v1548, 1.0
    %v1560 = vadd.f32 %v1550, 1.0
    %v1561 = vadd.f32 %v1552, 1.0
    %v1562 = vadd.f32 %v1554, 1.0
    %v1563 = vadd.f32 %v1556, 1.0
    %v1564 = vrcp.pop %v1557
    %v1565 = vmul.f32 1.0, %v1564
    %v1566 = vrcp.pop %v1558
    %v1567 = vmul.f32 1.0, %v1566
    %v1568 = vrcp.pop %v1559
    %v1569 = vmul.f32 1.0, %v1568
    %v1570 = vrcp.pop %v1560
    %v1571 = vmul.f32 1.0, %v1570
    %v1572 = vrcp.pop %v1561
    %v1573 = vmul.f32 1.0, %v1572
    %v1574 = vrcp.pop %v1562
    %v1575 = vmul.f32 1.0, %v1574
    %v1576 = vrcp.pop %v1563
    %v1577 = vmul.f32 1.0, %v1576
    %v1578 = vtanh.pop %v1523
    %v1579 = vtanh.pop %v1525
    %v1580 = vtanh.pop %v1527
    %v1581 = vtanh.pop %v1529
    %v1582 = vtanh.pop %v1531
    %v1583 = vtanh.pop %v1533
    %v1584 = vtanh.pop %v1535
    %v1585 = vxor.u32 %v1523, 2147483648
    %v1586 = vxor.u32 %v1525, 2147483648
    %v1587 = vxor.u32 %v1527, 2147483648
    %v1588 = vxor.u32 %v1529, 2147483648
    %v1589 = vxor.u32 %v1531, 2147483648
    %v1590 = vxor.u32 %v1533, 2147483648
    %v1591 = vxor.u32 %v1535, 2147483648
    %v1592 = vmul.f32 %v1585, 1.442695
    %v1593 = vpow.pop %v1592
    %v1594 = vmul.f32 %v1586, 1.442695
    %v1595 = vpow.pop %v1594
    %v1596 = vmul.f32 %v1587, 1.442695
    %v1597 = vpow.pop %v1596
    %v1598 = vmul.f32 %v1588, 1.442695
    %v1599 = vpow.pop %v1598
    %v1600 = vmul.f32 %v1589, 1.442695
    %v1601 = vpow.pop %v1600
    %v1602 = vmul.f32 %v1590, 1.442695
    %v1603 = vpow.pop %v1602
    %v1604 = vmul.f32 %v1591, 1.442695
    %v1605 = vpow.pop %v1604
    %v1606 = vadd.f32 %v1593, 1.0
    %v1607 = vadd.f32 %v1595, 1.0
    %v1608 = vadd.f32 %v1597, 1.0
    %v1609 = vadd.f32 %v1599, 1.0
    %v1610 = vadd.f32 %v1601, 1.0
    %v1611 = vadd.f32 %v1603, 1.0
    %v1612 = vadd.f32 %v1605, 1.0
    %v1613 = vrcp.pop %v1606
    %v1614 = vmul.f32 1.0, %v1613
    %v1615 = vrcp.pop %v1607
    %v1616 = vmul.f32 1.0, %v1615
    %v1617 = vrcp.pop %v1608
    %v1618 = vmul.f32 1.0, %v1617
    %v1619 = vrcp.pop %v1609
    %v1620 = vmul.f32 1.0, %v1619
    %v1621 = vrcp.pop %v1610
    %v1622 = vmul.f32 1.0, %v1621
    %v1623 = vrcp.pop %v1611
    %v1624 = vmul.f32 1.0, %v1623
    %v1625 = vrcp.pop %v1612
    %v1626 = vmul.f32 1.0, %v1625
    %v1627 = vmul.f32 %v1565, %v930
    %v1628 = vmul.f32 %v1567, %v930
    %v1629 = vmul.f32 %v1569, %v930
    %v1630 = vmul.f32 %v1571, %v930
    %v1631 = vmul.f32 %v1573, %v930
    %v1632 = vmul.f32 %v1575, %v930
    %v1633 = vmul.f32 %v1577, %v930
    %v1634 = vmul.f32 %v1565, %v1578
    %v1635 = vmul.f32 %v1567, %v1579
    %v1636 = vmul.f32 %v1569, %v1580
    %v1637 = vmul.f32 %v1571, %v1581
    %v1638 = vmul.f32 %v1573, %v1582
    %v1639 = vmul.f32 %v1575, %v1583
    %v1640 = vmul.f32 %v1577, %v1584
    %1648 = vrot.lane.b32.xlu0 %v1634, 64
    %v1649 = vpop.permute.xlu0 %1648
    %1650 = vrot.lane.b32.xlu0 %v1635, 64
    %v1651 = vpop.permute.xlu0 %1650
    %1652 = vrot.lane.b32.xlu0 %v1636, 64
    %v1653 = vpop.permute.xlu0 %1652
    %1654 = vrot.lane.b32.xlu0 %v1637, 64
    %v1655 = vpop.permute.xlu0 %1654
    %1656 = vrot.lane.b32.xlu0 %v1638, 64
    %v1657 = vpop.permute.xlu0 %1656
    %1658 = vrot.lane.b32.xlu0 %v1639, 64
    %v1659 = vpop.permute.xlu0 %1658
    %1660 = vrot.lane.b32.xlu0 %v1640, 64
    %v1661 = vpop.permute.xlu0 %1660
    %v1669 = vadd.f32 %v1627, %v1649
    %v1670 = vadd.f32 %v1628, %v1651
    %v1671 = vadd.f32 %v1629, %v1653
    %v1672 = vadd.f32 %v1630, %v1655
    %v1673 = vadd.f32 %v1631, %v1657
    %v1674 = vadd.f32 %v1632, %v1659
    %v1675 = vadd.f32 %v1633, %v1661
    %v1676 = vtanh.pop %v1669
    %v1677 = vtanh.pop %v1670
    %v1678 = vtanh.pop %v1671
    %v1679 = vtanh.pop %v1672
    %v1680 = vtanh.pop %v1673
    %v1681 = vtanh.pop %v1674
    %v1682 = vtanh.pop %v1675
    %v1683 = vmul.f32 %v1614, %v1676
    %v1684 = vmul.f32 %v1616, %v1677
    %v1685 = vmul.f32 %v1618, %v1678
    %v1686 = vmul.f32 %v1620, %v1679
    %v1687 = vmul.f32 %v1622, %v1680
    %v1688 = vmul.f32 %v1624, %v1681
    %v1689 = vmul.f32 %v1626, %v1682
    %v1690 = vpack.c.bf16 %v1684, %v1683
    %v1691 = vpack.c.bf16 %v1686, %v1685
    %v1692 = vpack.c.bf16 %v1688, %v1687
    %v1693 = vpack.c.bf16 %v1689, %v1689
    %v1694 = vld [vmem:[#allocation6 + $0x18] sm:$0xf]
    %v1695 = vld [vmem:[#allocation6 + $0x34] sm:$0xf]
    %v1696 = vld [vmem:[#allocation6 + $0x50] sm:$0xf]
    %v1697 = vld [vmem:[#allocation6 + $0x6c] sm:$0xf]
    %v1698 = vld [vmem:[#allocation6 + $0x88] sm:$0xf]
    %v1699 = vld [vmem:[#allocation6 + $0xa4] sm:$0xf]
    %v1700 = vld [vmem:[#allocation6 + $0xc0] sm:$0xf]
    %v1701 = vld [vmem:[#allocation6 + $0xdc] sm:$0xf]
    %1706 = vrot.lane.b32.xlu0 %v1690, 64
    %v1707 = vpop.permute.xlu0 %1706
    %1708 = vrot.lane.b32.xlu0 %v1691, 64
    %v1709 = vpop.permute.xlu0 %1708
    %1710 = vrot.lane.b32.xlu0 %v1692, 64
    %v1711 = vpop.permute.xlu0 %1710
    %1712 = vrot.lane.b32.xlu0 %v1693, 64
    %v1713 = vpop.permute.xlu0 %1712
    %v1722 = vunpack.c.l.b16 %v1694
    %v1723 = vunpack.c.l.b16 %v1695
    %v1724 = vunpack.c.l.b16 %v1696
    %v1725 = vunpack.c.l.b16 %v1697
    %v1726 = vunpack.c.l.b16 %v1698
    %v1727 = vunpack.c.l.b16 %v1699
    %v1728 = vunpack.c.l.b16 %v1700
    %v1729 = vunpack.c.l.b16 %v1701
    %v1730 = vpack.c.b16 %v1723, %v1722
    %v1731 = vpack.c.b16 %v1725, %v1724
    %v1732 = vpack.c.b16 %v1727, %v1726
    %v1733 = vpack.c.b16 %v1729, %v1728
    %v1739 = vsel %vm339, %v1707, 0
    %v1742 = vsel %vm339, %v1709, 0
    %v1745 = vsel %vm339, %v1711, 0
    %v1748 = vsel %vm339, %v1713, 0
    %1750 = vmatprep.subr.bf16.mxu0 0
    %1751 = vmatpush1.bf16.msra.mxu0 %v1730
    %1752 = vmatprep.subr.bf16.mxu0 0
    %1753 = vmatpush1.bf16.msra.mxu0 %v1731
    %1754 = vmatprep.subr.bf16.mxu0 0
    %1755 = vmatpush1.bf16.msra.mxu0 %v1732
    %1756 = vmatprep.subr.bf16.mxu0 0
    %1757 = vmatpush1.bf16.msra.mxu0 %v1733
    %1758 = vmatprep.subr.bf16.mxu0 0
    %1759 = vmatpush1.bf16.msra.mxu0 0
    %1760 = vmatprep.subr.bf16.mxu0 0
    %1761 = vmatpush1.bf16.msra.mxu0 0
    %1762 = vmatprep.subr.bf16.mxu0 0
    %1763 = vmatpush1.bf16.msra.mxu0 0
    %1764 = vmatprep.subr.bf16.mxu0 0
    %1765 = vmatpush1.bf16.msra.mxu0 0
    %1766 = vmatprep.subr.bf16.mxu0 0
    %1767 = vmatpush1.bf16.msra.mxu0 0
    %1768 = vmatprep.subr.bf16.mxu0 0
    %1769 = vmatpush1.bf16.msra.mxu0 0
    %1770 = vmatprep.subr.bf16.mxu0 0
    %1771 = vmatpush1.bf16.msra.mxu0 0
    %1772 = vmatprep.subr.bf16.mxu0 0
    %1773 = vmatpush1.bf16.msra.mxu0 0
    %1774 = vmatprep.subr.bf16.mxu0 0
    %1775 = vmatpush1.bf16.msra.mxu0 0
    %1776 = vmatprep.subr.bf16.mxu0 0
    %1777 = vmatpush1.bf16.msra.mxu0 0
    %1778 = vmatprep.subr.bf16.mxu0 0
    %1779 = vmatpush1.bf16.msra.mxu0 0
    %1780 = vmatprep.subr.bf16.mxu0 0
    %1781 = vmatpush1.bf16.msra.mxu0 0
    %1782 = vmatprep.mubr.bf16.mxu0 0
    %1783 = vmatmul.mubr.bf16.gmra.mrb[0].mxu0 %v1739
    %v1784 = vpop.f32.mrb[0].mxu0
    %v1785 = vadd.f32 %v1245, %v1784
    %v1786 = vpop.f32.mrb[0].mxu0
    %v1787 = vpop.f32.mrb[0].mxu0
    %v1788 = vadd.f32 %v1248, %v1787
    %v1789 = vpop.f32.mrb[0].mxu0
    %1790 = vmatprep.mubr.bf16.mxu0 0
    %1791 = vmatmul.mubr.bf16.gmra.mrb[0].mxu0 %v1742
    %v1792 = vpop.f32.mrb[0].mxu0
    %v1793 = vadd.f32 %v1253, %v1792
    %v1794 = vpop.f32.mrb[0].mxu0
    %v1795 = vpop.f32.mrb[0].mxu0
    %v1796 = vadd.f32 %v1256, %v1795
    %v1797 = vpop.f32.mrb[0].mxu0
    %1798 = vmatprep.mubr.bf16.mxu0 0
    %1799 = vmatmul.mubr.bf16.gmra.mrb[0].mxu0 %v1745
    %v1800 = vpop.f32.mrb[0].mxu0
    %v1801 = vadd.f32 %v1261, %v1800
    %v1802 = vpop.f32.mrb[0].mxu0
    %v1803 = vpop.f32.mrb[0].mxu0
    %v1804 = vadd.f32 %v1264, %v1803
    %v1805 = vpop.f32.mrb[0].mxu0
    %1806 = vmatprep.mubr.bf16.mxu0 0
    %1807 = vmatmul.mubr.bf16.gmra.mrb[0].mxu0 %v1748
    %v1808 = vpop.f32.mrb[0].mxu0
    %v1809 = vadd.f32 %v1269, %v1808
    %v1810 = vpop.f32.mrb[0].mxu0
    %v1811 = vpop.f32.mrb[0].mxu0
    %v1812 = vpop.f32.mrb[0].mxu0
    %1813 = vdwg.mxu0
    %v1814 = vadd.f32 %v1785, %v1521
    %v1815 = vadd.f32 %v1788, %v1521
    %v1816 = vadd.f32 %v1793, %v1521
    %v1817 = vadd.f32 %v1796, %v1521
    %v1818 = vadd.f32 %v1801, %v1521
    %v1819 = vadd.f32 %v1804, %v1521
    %v1820 = vadd.f32 %v1809, %v1521
    %1821 = vst [vmem:[#allocation8] sm:$0xff] %v1814
    %1822 = vst [vmem:[#allocation8 + $0x8] sm:$0xff] %v1815
    %1823 = vst [vmem:[#allocation8 + $0x10] sm:$0xff] %v1816
    %1824 = vst [vmem:[#allocation8 + $0x18] sm:$0xff] %v1817
    %1825 = vst [vmem:[#allocation8 + $0x20] sm:$0xff] %v1818
    %1826 = vst [vmem:[#allocation8 + $0x28] sm:$0xff] %v1819
    %1827 = vst [vmem:[#allocation8 + $0x30] sm:$0xff] %v1820
    // Predicated region
    $region30: #{tpu_custom_call.1} parent=1 // pred_check
      _
    $region31: #{tpu_custom_call.1} parent=1 // pred_check_branch
      %1829 = sbr.rel (0) target = $region33
    $region32: #{tpu_custom_call.1} parent=1 // pred_region
      %s1831 = ssub.s32 896, 896
      %1832 = vsyncadd [#allocation5], %s1831
      %s1833 = sshll.u32 [#allocation8], 4
      %s1834 = int_to_ptr.vmem [resolvable:$true] %s1833
      %1839 = dma.vmem_to_hbm [thread:$0]  %s1834, 896, %s5, [#allocation5], 128, 128, 8
    $region33: #{tpu_custom_call.1} parent=1 // pred_fallthru
      _
    // Predicated region
    $region34: #{tpu_custom_call.1} parent=1 // pred_check
      _
    $region35: #{tpu_custom_call.1} parent=1 // pred_check_branch
      %1841 = sbr.rel (0) target = $region37
    $region36: #{tpu_custom_call.1} parent=1 // pred_region
      %1842 = dma.done [#allocation5], 896
    $region37: #{tpu_custom_call.1} parent=1 // pred_fallthru
      _
    %1843 = vsyncpa [#allocation4], 1
    %1844 = vsyncpa [#allocation7], 1
    %1845 = vsyncpa [#allocation5], 1

</llo_original>
